<compile_context>
chip_gen: v5e
topology: v5e:2x2
jax: 0.10.0
libtpu: 0.0.40
codegen_flags: <defaults>
</compile_context>

<pallas_src>
import functools

import jax
import jax.numpy as jnp
from jax import lax
from jax.experimental import pallas as pl
from jax.experimental.pallas import tpu as pltpu

# ---------------- config: tiny synthetic BERT (same structure as bert-base) ---
VOCAB = 100
MAX_POS = 16
TYPE_VOCAB = 2
HIDDEN = 32
NUM_HEADS = 2
HEAD_DIM = HIDDEN // NUM_HEADS
INTERMEDIATE = 4 * HIDDEN
NUM_LAYERS = 2
# TODO(synk): original module uses num_labels = len(sorted_unique_labels) which is 0
# for the empty set in the snippet; use 4 labels so the classification head is non-degenerate.
NUM_LABELS = 4
LN_EPS = 1e-12

VMEM_SPEC = pl.BlockSpec(memory_space=pltpu.MemorySpace.VMEM)


# --------------------------- in-kernel helpers ---------------------------------
def _layernorm(x, gamma, beta):
    mu = jnp.mean(x, axis=-1, keepdims=True)
    xc = x - mu
    var = jnp.mean(xc * xc, axis=-1, keepdims=True)
    inv = lax.rsqrt(var + LN_EPS)
    return xc * inv * gamma + beta


def _gelu(y):
    # TODO(synk): HF BERT uses exact (erf) GELU; tanh approximation used to stay
    # within guaranteed Mosaic elementwise lowerings.
    c = 0.7978845608028654  # sqrt(2/pi)
    return 0.5 * y * (1.0 + jnp.tanh(c * (y + 0.044715 * y * y * y)))


def _const_spec(shape):
    n = len(shape)
    return pl.BlockSpec(shape, lambda i, n=n: (0,) * n)


# ------------------------------- Pallas kernels --------------------------------
def _embed_ln_kernel(x_ref, g_ref, b_ref, o_ref):
    o_ref[...] = _layernorm(x_ref[...], g_ref[...], b_ref[...]).astype(o_ref.dtype)


def embed_layernorm(x, gamma, beta):
    n, h = x.shape
    row_tile = 8 if n % 8 == 0 else n
    return pl.pallas_call(
        _embed_ln_kernel,
        grid=(n // row_tile,),
        out_shape=jax.ShapeDtypeStruct((n, h), jnp.float32),
        in_specs=[pl.BlockSpec((row_tile, h), lambda i: (i, 0)),
                  pl.BlockSpec((1, h), lambda i: (0, 0)),
                  pl.BlockSpec((1, h), lambda i: (0, 0))],
        out_specs=pl.BlockSpec((row_tile, h), lambda i: (i, 0)),
        compiler_params=pltpu.CompilerParams(dimension_semantics=("parallel",)),
    )(x, gamma, beta)


def _encoder_layer_kernel(x_ref, bias_ref, qkv_w_ref, qkv_b_ref, ao_w_ref, ao_b_ref,
                          ln1_g_ref, ln1_b_ref, i_w_ref, i_b_ref, o_w_ref, o_b_ref,
                          ln2_g_ref, ln2_b_ref, o_ref, *, num_heads, head_dim):
    x = x_ref[...]                                   # (S, H) f32 activations of one batch
    xb = x.astype(jnp.bfloat16)
    bias = bias_ref[...]                             # (1, S) additive attention-mask bias
    scale = 1.0 / (head_dim ** 0.5)

    # ---- multi-head self-attention (all heads of this batch, fully in VMEM) ----
    attn = None
    for h in range(num_heads):
        qh = jnp.dot(xb, qkv_w_ref[h], preferred_element_type=jnp.float32) + qkv_b_ref[h]
        kh = jnp.dot(xb, qkv_w_ref[num_heads + h],
                     preferred_element_type=jnp.float32) + qkv_b_ref[num_heads + h]
        vh = jnp.dot(xb, qkv_w_ref[2 * num_heads + h],
                     preferred_element_type=jnp.float32) + qkv_b_ref[2 * num_heads + h]
        s = lax.dot_general(qh.astype(jnp.bfloat16), kh.astype(jnp.bfloat16),
                            (((1,), (1,)), ((), ())),
                            preferred_element_type=jnp.float32) * scale + bias
        s = s - jnp.max(s, axis=-1, keepdims=True)
        p = jnp.exp(s)
        p = p * pl.reciprocal(jnp.sum(p, axis=-1, keepdims=True), approx=True)
        ctx_h = jnp.dot(p.astype(jnp.bfloat16), vh.astype(jnp.bfloat16),
                        preferred_element_type=jnp.float32)          # (S, head_dim)
        # output projection applied per head and summed == dense(concat(ctx), ao_w)
        contrib = jnp.dot(ctx_h.astype(jnp.bfloat16), ao_w_ref[h],
                          preferred_element_type=jnp.float32)        # (S, H)
        attn = contrib if attn is None else attn + contrib

    attn_out = attn + ao_b_ref[...]
    x1 = _layernorm(attn_out + x, ln1_g_ref[...], ln1_b_ref[...])

    # ---- feed-forward ----
    hmid = jnp.dot(x1.astype(jnp.bfloat16), i_w_ref[...],
                   preferred_element_type=jnp.float32) + i_b_ref[...]
    hmid = _gelu(hmid)
    ffn = jnp.dot(hmid.astype(jnp.bfloat16), o_w_ref[...],
                  preferred_element_type=jnp.float32) + o_b_ref[...]
    o_ref[...] = _layernorm(ffn + x1, ln2_g_ref[...], ln2_b_ref[...]).astype(o_ref.dtype)


def encoder_layer(x, bias, lp, batch, seq):
    kernel = functools.partial(_encoder_layer_kernel,
                               num_heads=NUM_HEADS, head_dim=HEAD_DIM)
    return pl.pallas_call(
        kernel,
        grid=(batch,),
        out_shape=jax.ShapeDtypeStruct((batch * seq, HIDDEN), jnp.float32),
        in_specs=[
            pl.BlockSpec((seq, HIDDEN), lambda i: (i, 0)),               # x rows of batch i
            pl.BlockSpec((pl.Squeezed(), 1, seq), lambda i: (i, 0, 0)),  # mask bias of batch i
            _const_spec((3 * NUM_HEADS, HIDDEN, HEAD_DIM)),              # qkv_w (per-head packed)
            _const_spec((3 * NUM_HEADS, 1, HEAD_DIM)),                   # qkv_b
            _const_spec((NUM_HEADS, HEAD_DIM, HIDDEN)),                  # ao_w (per-head packed)
            _const_spec((1, HIDDEN)),                                    # ao_b
            _const_spec((1, HIDDEN)), _const_spec((1, HIDDEN)),          # attn LN gamma/beta
            _const_spec((HIDDEN, INTERMEDIATE)), _const_spec((1, INTERMEDIATE)),
            _const_spec((INTERMEDIATE, HIDDEN)), _const_spec((1, HIDDEN)),
            _const_spec((1, HIDDEN)), _const_spec((1, HIDDEN)),          # out LN gamma/beta
        ],
        out_specs=pl.BlockSpec((seq, HIDDEN), lambda i: (i, 0)),
        compiler_params=pltpu.CompilerParams(dimension_semantics=("parallel",)),
    )(x, bias, lp["qkv_w"], lp["qkv_b"], lp["ao_w"], lp["ao_b"],
      lp["ln1_g"], lp["ln1_b"], lp["i_w"], lp["i_b"], lp["o_w"], lp["o_b"],
      lp["ln2_g"], lp["ln2_b"])


def _cls_ce_kernel(x_ref, w_ref, b_ref, labels_ref, logits_ref, loss_ref):
    logits = jnp.dot(x_ref[...].astype(jnp.bfloat16), w_ref[...],
                     preferred_element_type=jnp.float32) + b_ref[...]   # (N, L) f32
    logits_ref[...] = logits.astype(logits_ref.dtype)
    labels = labels_ref[...]                                            # (N, 1) i32
    m = jnp.max(logits, axis=-1, keepdims=True)
    z = logits - m
    lse = jnp.log(jnp.sum(jnp.exp(z), axis=-1, keepdims=True)) + m
    cls_idx = lax.broadcasted_iota(jnp.int32, logits.shape, 1)
    picked = jnp.sum(jnp.where(cls_idx == labels, logits, 0.0), axis=-1, keepdims=True)
    valid = (labels != -100).astype(jnp.float32)                        # CE ignore_index
    nll = (lse - picked) * valid
    loss_sum = jnp.sum(nll, axis=0, keepdims=True)                      # (1, 1)
    count = jnp.maximum(jnp.sum(valid, axis=0, keepdims=True), 1.0)
    loss_ref[...] = loss_sum / count


def classifier_and_loss(x, w, b, labels):
    n = x.shape[0]
    logits, loss = pl.pallas_call(
        _cls_ce_kernel,
        out_shape=(jax.ShapeDtypeStruct((n, NUM_LABELS), jnp.float32),
                   jax.ShapeDtypeStruct((1, 1), jnp.float32)),
        in_specs=[VMEM_SPEC, VMEM_SPEC, VMEM_SPEC, VMEM_SPEC],
        out_specs=(VMEM_SPEC, VMEM_SPEC),
    )(x, w, b, labels)
    return loss[0, 0], logits


# ------------------------------- model wrapper --------------------------------
def init_params(key):
    def normal(k, shape):
        return 0.02 * jax.random.normal(k, shape, dtype=jnp.float32)

    def qkv_heads(w):  # (H, H) -> (NUM_HEADS, H, HEAD_DIM); head h == w[:, h*D:(h+1)*D]
        return jnp.transpose(w.reshape(HIDDEN, NUM_HEADS, HEAD_DIM), (1, 0, 2))

    keys = jax.random.split(key, 4 + NUM_LAYERS)
    params = {
        "word_emb": normal(keys[0], (VOCAB, HIDDEN)),
        "pos_emb": normal(keys[1], (MAX_POS, HIDDEN)),
        "type_emb": normal(keys[2], (TYPE_VOCAB, HIDDEN)),
        "emb_ln_g": jnp.ones((1, HIDDEN), jnp.float32),
        "emb_ln_b": jnp.zeros((1, HIDDEN), jnp.float32),
        "cls_w": normal(keys[3], (HIDDEN, NUM_LABELS)).astype(jnp.bfloat16),
        "cls_b": jnp.zeros((1, NUM_LABELS), jnp.float32),
        "layers": [],
    }
    for l in range(NUM_LAYERS):
        lk = jax.random.split(keys[4 + l], 6)
        qw, kw, vw = normal(lk[0], (HIDDEN, HIDDEN)), normal(lk[1], (HIDDEN, HIDDEN)), normal(lk[2], (HIDDEN, HIDDEN))
        ao_w = normal(lk[3], (HIDDEN, HIDDEN))
        params["layers"].append({
            # packed per-head: [q_h0..q_hN, k_h0..k_hN, v_h0..v_hN]
            "qkv_w": jnp.concatenate([qkv_heads(qw), qkv_heads(kw), qkv_heads(vw)],
                                     axis=0).astype(jnp.bfloat16),
            "qkv_b": jnp.zeros((3 * NUM_HEADS, 1, HEAD_DIM), jnp.float32),
            "ao_w": ao_w.reshape(NUM_HEADS, HEAD_DIM, HIDDEN).astype(jnp.bfloat16),
            "ao_b": jnp.zeros((1, HIDDEN), jnp.float32),
            "ln1_g": jnp.ones((1, HIDDEN), jnp.float32),
            "ln1_b": jnp.zeros((1, HIDDEN), jnp.float32),
            "i_w": normal(lk[4], (HIDDEN, INTERMEDIATE)).astype(jnp.bfloat16),
            "i_b": jnp.zeros((1, INTERMEDIATE), jnp.float32),
            "o_w": normal(lk[5], (INTERMEDIATE, HIDDEN)).astype(jnp.bfloat16),
            "o_b": jnp.zeros((1, HIDDEN), jnp.float32),
            "ln2_g": jnp.ones((1, HIDDEN), jnp.float32),
            "ln2_b": jnp.zeros((1, HIDDEN), jnp.float32),
        })
    return params


def bert_forward(params, input_id, mask, label):
    """Mirror of BertModel.forward: returns (loss, logits) like return_dict=False."""
    b, s = input_id.shape

    # ---- embeddings (gathers kept as JAX glue; LayerNorm in Pallas) ----
    pos_ids = jnp.arange(s)
    x = (jnp.take(params["word_emb"], input_id, axis=0)
         + jnp.take(params["pos_emb"], pos_ids, axis=0)[None, :, :]
         + params["type_emb"][0][None, None, :])          # token_type_ids = 0
    x = x.reshape(b * s, HIDDEN).astype(jnp.float32)
    x = embed_layernorm(x, params["emb_ln_g"], params["emb_ln_b"])
    # TODO(synk): dropout layers omitted (deterministic / eval behavior).

    # additive attention-mask bias, kept per-batch (never repeated per head)
    bias = ((1.0 - mask.astype(jnp.float32)) * -10000.0).reshape(b, 1, s)

    for lp in params["layers"]:
        x = encoder_layer(x, bias, lp, b, s)

    labels = label.reshape(b * s, 1).astype(jnp.int32)
    loss, logits = classifier_and_loss(x, params["cls_w"], params["cls_b"], labels)
    return loss, logits.reshape(b, s, NUM_LABELS)


if __name__ == "__main__":
    key = jax.random.PRNGKey(0)
    pkey, ikey, lkey = jax.random.split(key, 3)
    params = init_params(pkey)

    B, S = 2, 8
    input_id = jax.random.randint(ikey, (B, S), 0, VOCAB, dtype=jnp.int32)
    mask = jnp.ones((B, S), dtype=jnp.int32)
    label = jax.random.randint(lkey, (B, S), 0, NUM_LABELS, dtype=jnp.int32)

    loss, logits = jax.jit(bert_forward)(params, input_id, mask, label)
    jax.block_until_ready((loss, logits))
    assert logits.shape == (B, S, NUM_LABELS)
    assert bool(jnp.isfinite(loss))
    print("KERNEL_OK")
</pallas_src>

<mosaic_0001>
module attributes {stable_mosaic.version = 11 : i64} {
  func.func @_embed_ln_kernel(%arg0: i32, %arg1: memref<8x32xf32, #tpu.memory_space<vmem>>, %arg2: memref<1x32xf32, #tpu.memory_space<vmem>>, %arg3: memref<1x32xf32, #tpu.memory_space<vmem>>, %arg4: memref<8x32xf32, #tpu.memory_space<vmem>>) attributes {dimension_semantics = [#tpu.dimension_semantics<parallel>], iteration_bounds = array<i64: 2>, scalar_prefetch = 0 : i64, scratch_operands = 0 : i64, tpu.core_type = #tpu.core_type<tc>, window_params = [{transform_indices = @transform_0, window_bounds = array<i64: 8, 32>}, {pipeline_mode = #tpu.pipeline_mode<synchronous>, transform_indices = @transform_1, window_bounds = array<i64: 1, 32>}, {pipeline_mode = #tpu.pipeline_mode<synchronous>, transform_indices = @transform_2, window_bounds = array<i64: 1, 32>}, {transform_indices = @transform_3, window_bounds = array<i64: 8, 32>}]} {
    %c0 = arith.constant 0 : index
    %c0_0 = arith.constant 0 : index
    %0 = vector.load %arg1[%c0, %c0_0] : memref<8x32xf32, #tpu.memory_space<vmem>>, vector<8x32xf32>
    %c0_1 = arith.constant 0 : index
    %c0_2 = arith.constant 0 : index
    %1 = vector.load %arg2[%c0_1, %c0_2] : memref<1x32xf32, #tpu.memory_space<vmem>>, vector<1x32xf32>
    %c0_3 = arith.constant 0 : index
    %c0_4 = arith.constant 0 : index
    %2 = vector.load %arg3[%c0_3, %c0_4] : memref<1x32xf32, #tpu.memory_space<vmem>>, vector<1x32xf32>
    %cst = arith.constant dense<0.000000e+00> : vector<8xf32>
    %3 = vector.multi_reduction <add>, %0, %cst [1] : vector<8x32xf32> to vector<8xf32>
    %4 = vector.shape_cast %3 : vector<8xf32> to vector<8x1xf32>
    %cst_5 = arith.constant 3.200000e+01 : f32
    %5 = vector.broadcast %cst_5 : f32 to vector<8x1xf32>
    %6 = arith.divf %4, %5 : vector<8x1xf32>
    %7 = vector.broadcast %6 : vector<8x1xf32> to vector<8x32xf32>
    %8 = arith.subf %0, %7 : vector<8x32xf32>
    %9 = arith.mulf %8, %8 : vector<8x32xf32>
    %cst_6 = arith.constant dense<0.000000e+00> : vector<8xf32>
    %10 = vector.multi_reduction <add>, %9, %cst_6 [1] : vector<8x32xf32> to vector<8xf32>
    %11 = vector.shape_cast %10 : vector<8xf32> to vector<8x1xf32>
    %cst_7 = arith.constant 3.200000e+01 : f32
    %12 = vector.broadcast %cst_7 : f32 to vector<8x1xf32>
    %13 = arith.divf %11, %12 : vector<8x1xf32>
    %cst_8 = arith.constant 9.99999996E-13 : f32
    %14 = vector.broadcast %cst_8 : f32 to vector<8x1xf32>
    %15 = arith.addf %13, %14 : vector<8x1xf32>
    %16 = math.rsqrt %15 : vector<8x1xf32>
    %17 = vector.broadcast %16 : vector<8x1xf32> to vector<8x32xf32>
    %18 = arith.mulf %8, %17 : vector<8x32xf32>
    %19 = vector.broadcast %1 : vector<1x32xf32> to vector<8x32xf32>
    %20 = arith.mulf %18, %19 : vector<8x32xf32>
    %21 = vector.broadcast %2 : vector<1x32xf32> to vector<8x32xf32>
    %22 = arith.addf %20, %21 : vector<8x32xf32>
    %c0_9 = arith.constant 0 : index
    %c0_10 = arith.constant 0 : index
    %23 = vector.load %arg4[%c0_9, %c0_10] : memref<8x32xf32, #tpu.memory_space<vmem>>, vector<8x32xf32>
    tpu.vector_store %arg4[%c0_9, %c0_10], %22 {strides = array<i32>} : memref<8x32xf32, #tpu.memory_space<vmem>>, vector<8x32xf32>,
    return
  }
  func.func @transform_0(%arg0: i32) -> (i32, i32) {
    %c0_i32 = arith.constant 0 : i32
    %c0_i32_0 = arith.constant 0 : i32
    return %arg0, %c0_i32 : i32, i32
  }
  func.func @transform_1(%arg0: i32) -> (i32, i32) {
    %c0_i32 = arith.constant 0 : i32
    %c0_i32_0 = arith.constant 0 : i32
    %c0_i32_1 = arith.constant 0 : i32
    return %c0_i32, %c0_i32_0 : i32, i32
  }
  func.func @transform_2(%arg0: i32) -> (i32, i32) {
    %c0_i32 = arith.constant 0 : i32
    %c0_i32_0 = arith.constant 0 : i32
    %c0_i32_1 = arith.constant 0 : i32
    return %c0_i32, %c0_i32_0 : i32, i32
  }
  func.func @transform_3(%arg0: i32) -> (i32, i32) {
    %c0_i32 = arith.constant 0 : i32
    %c0_i32_0 = arith.constant 0 : i32
    return %arg0, %c0_i32 : i32, i32
  }
}

module attributes {stable_mosaic.version = 11 : i64} {
  func.func @_cls_ce_kernel(%arg0: memref<16x32xf32, #tpu.memory_space<vmem>>, %arg1: memref<32x4xbf16, #tpu.memory_space<vmem>>, %arg2: memref<1x4xf32, #tpu.memory_space<vmem>>, %arg3: memref<16x1xi32, #tpu.memory_space<vmem>>, %arg4: memref<16x4xf32, #tpu.memory_space<vmem>>, %arg5: memref<1x1xf32, #tpu.memory_space<vmem>>) attributes {dimension_semantics = [], scalar_prefetch = 0 : i64, scratch_operands = 0 : i64, tpu.core_type = #tpu.core_type<tc>} {
    %c0 = arith.constant 0 : index
    %c0_0 = arith.constant 0 : index
    %0 = vector.load %arg0[%c0, %c0_0] : memref<16x32xf32, #tpu.memory_space<vmem>>, vector<16x32xf32>
    %1 = arith.truncf %0 : vector<16x32xf32> to vector<16x32xbf16>
    %c0_1 = arith.constant 0 : index
    %c0_2 = arith.constant 0 : index
    %2 = vector.load %arg1[%c0_1, %c0_2] : memref<32x4xbf16, #tpu.memory_space<vmem>>, vector<32x4xbf16>
    %cst = arith.constant dense<0.000000e+00> : vector<16x4xf32>
    %3 = tpu.matmul %1, %2, %cst {dimension_numbers = #tpu.dot_dimension_numbers<[1], [0], [0], [1], [0, 0, 1, 1], [], []>} : vector<16x32xbf16>, vector<32x4xbf16>, vector<16x4xf32> -> vector<16x4xf32>
    %c0_3 = arith.constant 0 : index
    %c0_4 = arith.constant 0 : index
    %4 = vector.load %arg2[%c0_3, %c0_4] : memref<1x4xf32, #tpu.memory_space<vmem>>, vector<1x4xf32>
    %5 = vector.broadcast %4 : vector<1x4xf32> to vector<16x4xf32>
    %6 = arith.addf %3, %5 : vector<16x4xf32>
    %c0_5 = arith.constant 0 : index
    %c0_6 = arith.constant 0 : index
    %7 = vector.load %arg4[%c0_5, %c0_6] : memref<16x4xf32, #tpu.memory_space<vmem>>, vector<16x4xf32>
    tpu.vector_store %arg4[%c0_5, %c0_6], %6 {strides = array<i32>} : memref<16x4xf32, #tpu.memory_space<vmem>>, vector<16x4xf32>,
    %c0_7 = arith.constant 0 : index
    %c0_8 = arith.constant 0 : index
    %8 = vector.load %arg3[%c0_7, %c0_8] : memref<16x1xi32, #tpu.memory_space<vmem>>, vector<16x1xi32>
    %cst_9 = arith.constant dense<0xFF800000> : vector<16xf32>
    %9 = vector.multi_reduction <maximumf>, %6, %cst_9 [1] : vector<16x4xf32> to vector<16xf32>
    %10 = vector.shape_cast %9 : vector<16xf32> to vector<16x1xf32>
    %11 = vector.broadcast %10 : vector<16x1xf32> to vector<16x4xf32>
    %12 = arith.subf %6, %11 : vector<16x4xf32>
    %13 = math.exp %12 : vector<16x4xf32>
    %cst_10 = arith.constant dense<0.000000e+00> : vector<16xf32>
    %14 = vector.multi_reduction <add>, %13, %cst_10 [1] : vector<16x4xf32> to vector<16xf32>
    %15 = vector.shape_cast %14 : vector<16xf32> to vector<16x1xf32>
    %16 = math.log %15 : vector<16x1xf32>
    %17 = arith.addf %16, %10 : vector<16x1xf32>
    %18 = tpu.iota {dimensions = array<i32: 1>} : vector<16x4xi32>
    %19 = vector.broadcast %8 : vector<16x1xi32> to vector<16x4xi32>
    %20 = arith.cmpi eq, %18, %19 : vector<16x4xi32>
    %cst_11 = arith.constant 0.000000e+00 : f32
    %21 = vector.broadcast %cst_11 : f32 to vector<16x4xf32>
    %22 = arith.select %20, %6, %21 : vector<16x4xi1>, vector<16x4xf32>
    %cst_12 = arith.constant dense<0.000000e+00> : vector<16xf32>
    %23 = vector.multi_reduction <add>, %22, %cst_12 [1] : vector<16x4xf32> to vector<16xf32>
    %24 = vector.shape_cast %23 : vector<16xf32> to vector<16x1xf32>
    %c-100_i32 = arith.constant -100 : i32
    %25 = vector.broadcast %c-100_i32 : i32 to vector<16x1xi32>
    %26 = arith.cmpi ne, %8, %25 : vector<16x1xi32>
    %27 = arith.extui %26 : vector<16x1xi1> to vector<16x1xi32>
    %28 = arith.sitofp %27 : vector<16x1xi32> to vector<16x1xf32>
    %29 = arith.subf %17, %24 : vector<16x1xf32>
    %30 = arith.mulf %29, %28 : vector<16x1xf32>
    %cst_13 = arith.constant dense<0.000000e+00> : vector<1xf32>
    %31 = vector.multi_reduction <add>, %30, %cst_13 [0] : vector<16x1xf32> to vector<1xf32>
    %32 = vector.shape_cast %31 : vector<1xf32> to vector<1x1xf32>
    %cst_14 = arith.constant dense<0.000000e+00> : vector<1xf32>
    %33 = vector.multi_reduction <add>, %28, %cst_14 [0] : vector<16x1xf32> to vector<1xf32>
    %34 = vector.shape_cast %33 : vector<1xf32> to vector<1x1xf32>
    %cst_15 = arith.constant 1.000000e+00 : f32
    %35 = vector.broadcast %cst_15 : f32 to vector<1x1xf32>
    %36 = arith.maximumf %34, %35 : vector<1x1xf32>
    %37 = arith.divf %32, %36 : vector<1x1xf32>
    %c0_16 = arith.constant 0 : index
    %c0_17 = arith.constant 0 : index
    %38 = vector.load %arg5[%c0_16, %c0_17] : memref<1x1xf32, #tpu.memory_space<vmem>>, vector<1x1xf32>
    tpu.vector_store %arg5[%c0_16, %c0_17], %37 {strides = array<i32>} : memref<1x1xf32, #tpu.memory_space<vmem>>, vector<1x1xf32>,
    return
  }
}

module attributes {stable_mosaic.version = 11 : i64} {
  func.func @_encoder_layer_kernel(%arg0: i32, %arg1: memref<8x32xf32, #tpu.memory_space<vmem>>, %arg2: memref<1x1x8xf32, #tpu.memory_space<vmem>>, %arg3: memref<6x32x16xbf16, #tpu.memory_space<vmem>>, %arg4: memref<6x1x16xf32, #tpu.memory_space<vmem>>, %arg5: memref<2x16x32xbf16, #tpu.memory_space<vmem>>, %arg6: memref<1x32xf32, #tpu.memory_space<vmem>>, %arg7: memref<1x32xf32, #tpu.memory_space<vmem>>, %arg8: memref<1x32xf32, #tpu.memory_space<vmem>>, %arg9: memref<32x128xbf16, #tpu.memory_space<vmem>>, %arg10: memref<1x128xf32, #tpu.memory_space<vmem>>, %arg11: memref<128x32xbf16, #tpu.memory_space<vmem>>, %arg12: memref<1x32xf32, #tpu.memory_space<vmem>>, %arg13: memref<1x32xf32, #tpu.memory_space<vmem>>, %arg14: memref<1x32xf32, #tpu.memory_space<vmem>>, %arg15: memref<8x32xf32, #tpu.memory_space<vmem>>) attributes {dimension_semantics = [#tpu.dimension_semantics<parallel>], iteration_bounds = array<i64: 2>, scalar_prefetch = 0 : i64, scratch_operands = 0 : i64, tpu.core_type = #tpu.core_type<tc>, window_params = [{transform_indices = @transform_0, window_bounds = array<i64: 8, 32>}, {transform_indices = @transform_1, window_bounds = array<i64: 1, 1, 8>}, {pipeline_mode = #tpu.pipeline_mode<synchronous>, transform_indices = @transform_2, window_bounds = array<i64: 6, 32, 16>}, {pipeline_mode = #tpu.pipeline_mode<synchronous>, transform_indices = @transform_3, window_bounds = array<i64: 6, 1, 16>}, {pipeline_mode = #tpu.pipeline_mode<synchronous>, transform_indices = @transform_4, window_bounds = array<i64: 2, 16, 32>}, {pipeline_mode = #tpu.pipeline_mode<synchronous>, transform_indices = @transform_5, window_bounds = array<i64: 1, 32>}, {pipeline_mode = #tpu.pipeline_mode<synchronous>, transform_indices = @transform_6, window_bounds = array<i64: 1, 32>}, {pipeline_mode = #tpu.pipeline_mode<synchronous>, transform_indices = @transform_7, window_bounds = array<i64: 1, 32>}, {pipeline_mode = #tpu.pipeline_mode<synchronous>, transform_indices = @transform_8, window_bounds = array<i64: 32, 128>}, {pipeline_mode = #tpu.pipeline_mode<synchronous>, transform_indices = @transform_9, window_bounds = array<i64: 1, 128>}, {pipeline_mode = #tpu.pipeline_mode<synchronous>, transform_indices = @transform_10, window_bounds = array<i64: 128, 32>}, {pipeline_mode = #tpu.pipeline_mode<synchronous>, transform_indices = @transform_11, window_bounds = array<i64: 1, 32>}, {pipeline_mode = #tpu.pipeline_mode<synchronous>, transform_indices = @transform_12, window_bounds = array<i64: 1, 32>}, {pipeline_mode = #tpu.pipeline_mode<synchronous>, transform_indices = @transform_13, window_bounds = array<i64: 1, 32>}, {transform_indices = @transform_14, window_bounds = array<i64: 8, 32>}]} {
    %c0 = arith.constant 0 : index
    %c0_0 = arith.constant 0 : index
    %0 = vector.load %arg1[%c0, %c0_0] : memref<8x32xf32, #tpu.memory_space<vmem>>, vector<8x32xf32>
    %1 = arith.truncf %0 : vector<8x32xf32> to vector<8x32xbf16>
    %c0_1 = arith.constant 0 : index
    %c0_2 = arith.constant 0 : index
    %c0_3 = arith.constant 0 : index
    %2 = vector.load %arg2[%c0_1, %c0_2, %c0_3] : memref<1x1x8xf32, #tpu.memory_space<vmem>>, vector<1x1x8xf32>
    %3 = vector.shape_cast %2 : vector<1x1x8xf32> to vector<1x8xf32>
    %c0_4 = arith.constant 0 : index
    %c0_5 = arith.constant 0 : index
    %c0_6 = arith.constant 0 : index
    %4 = vector.load %arg3[%c0_4, %c0_5, %c0_6] : memref<6x32x16xbf16, #tpu.memory_space<vmem>>, vector<1x32x16xbf16>
    %5 = vector.shape_cast %4 : vector<1x32x16xbf16> to vector<32x16xbf16>
    %cst = arith.constant dense<0.000000e+00> : vector<8x16xf32>
    %6 = tpu.matmul %1, %5, %cst {dimension_numbers = #tpu.dot_dimension_numbers<[1], [0], [0], [1], [0, 0, 1, 1], [], []>} : vector<8x32xbf16>, vector<32x16xbf16>, vector<8x16xf32> -> vector<8x16xf32>
    %c0_7 = arith.constant 0 : index
    %c0_8 = arith.constant 0 : index
    %c0_9 = arith.constant 0 : index
    %7 = vector.load %arg4[%c0_7, %c0_8, %c0_9] : memref<6x1x16xf32, #tpu.memory_space<vmem>>, vector<1x1x16xf32>
    %8 = vector.shape_cast %7 : vector<1x1x16xf32> to vector<1x16xf32>
    %9 = vector.broadcast %8 : vector<1x16xf32> to vector<8x16xf32>
    %10 = arith.addf %6, %9 : vector<8x16xf32>
    %c2 = arith.constant 2 : index
    %c0_10 = arith.constant 0 : index
    %c0_11 = arith.constant 0 : index
    %11 = vector.load %arg3[%c2, %c0_10, %c0_11] : memref<6x32x16xbf16, #tpu.memory_space<vmem>>, vector<1x32x16xbf16>
    %12 = vector.shape_cast %11 : vector<1x32x16xbf16> to vector<32x16xbf16>
    %cst_12 = arith.constant dense<0.000000e+00> : vector<8x16xf32>
    %13 = tpu.matmul %1, %12, %cst_12 {dimension_numbers = #tpu.dot_dimension_numbers<[1], [0], [0], [1], [0, 0, 1, 1], [], []>} : vector<8x32xbf16>, vector<32x16xbf16>, vector<8x16xf32> -> vector<8x16xf32>
    %c2_13 = arith.constant 2 : index
    %c0_14 = arith.constant 0 : index
    %c0_15 = arith.constant 0 : index
    %14 = vector.load %arg4[%c2_13, %c0_14, %c0_15] : memref<6x1x16xf32, #tpu.memory_space<vmem>>, vector<1x1x16xf32>
    %15 = vector.shape_cast %14 : vector<1x1x16xf32> to vector<1x16xf32>
    %16 = vector.broadcast %15 : vector<1x16xf32> to vector<8x16xf32>
    %17 = arith.addf %13, %16 : vector<8x16xf32>
    %c4 = arith.constant 4 : index
    %c0_16 = arith.constant 0 : index
    %c0_17 = arith.constant 0 : index
    %18 = vector.load %arg3[%c4, %c0_16, %c0_17] : memref<6x32x16xbf16, #tpu.memory_space<vmem>>, vector<1x32x16xbf16>
    %19 = vector.shape_cast %18 : vector<1x32x16xbf16> to vector<32x16xbf16>
    %cst_18 = arith.constant dense<0.000000e+00> : vector<8x16xf32>
    %20 = tpu.matmul %1, %19, %cst_18 {dimension_numbers = #tpu.dot_dimension_numbers<[1], [0], [0], [1], [0, 0, 1, 1], [], []>} : vector<8x32xbf16>, vector<32x16xbf16>, vector<8x16xf32> -> vector<8x16xf32>
    %c4_19 = arith.constant 4 : index
    %c0_20 = arith.constant 0 : index
    %c0_21 = arith.constant 0 : index
    %21 = vector.load %arg4[%c4_19, %c0_20, %c0_21] : memref<6x1x16xf32, #tpu.memory_space<vmem>>, vector<1x1x16xf32>
    %22 = vector.shape_cast %21 : vector<1x1x16xf32> to vector<1x16xf32>
    %23 = vector.broadcast %22 : vector<1x16xf32> to vector<8x16xf32>
    %24 = arith.addf %20, %23 : vector<8x16xf32>
    %25 = arith.truncf %10 : vector<8x16xf32> to vector<8x16xbf16>
    %26 = arith.truncf %17 : vector<8x16xf32> to vector<8x16xbf16>
    %cst_22 = arith.constant dense<0.000000e+00> : vector<8x8xf32>
    %27 = tpu.matmul %25, %26, %cst_22 {dimension_numbers = #tpu.dot_dimension_numbers<[1], [1], [0], [0], [0, 0, 1, 0], [], []>} : vector<8x16xbf16>, vector<8x16xbf16>, vector<8x8xf32> -> vector<8x8xf32>
    %cst_23 = arith.constant 2.500000e-01 : f32
    %28 = vector.broadcast %cst_23 : f32 to vector<8x8xf32>
    %29 = arith.mulf %27, %28 : vector<8x8xf32>
    %30 = vector.broadcast %3 : vector<1x8xf32> to vector<8x8xf32>
    %31 = arith.addf %29, %30 : vector<8x8xf32>
    %cst_24 = arith.constant dense<0xFF800000> : vector<8xf32>
    %32 = vector.multi_reduction <maximumf>, %31, %cst_24 [1] : vector<8x8xf32> to vector<8xf32>
    %33 = vector.shape_cast %32 : vector<8xf32> to vector<8x1xf32>
    %34 = vector.broadcast %33 : vector<8x1xf32> to vector<8x8xf32>
    %35 = arith.subf %31, %34 : vector<8x8xf32>
    %36 = math.exp %35 : vector<8x8xf32>
    %cst_25 = arith.constant dense<0.000000e+00> : vector<8xf32>
    %37 = vector.multi_reduction <add>, %36, %cst_25 [1] : vector<8x8xf32> to vector<8xf32>
    %38 = vector.shape_cast %37 : vector<8xf32> to vector<8x1xf32>
    %39 = tpu.reciprocal %38 {approx = true} : vector<8x1xf32> -> vector<8x1xf32>
    %40 = vector.broadcast %39 : vector<8x1xf32> to vector<8x8xf32>
    %41 = arith.mulf %36, %40 : vector<8x8xf32>
    %42 = arith.truncf %41 : vector<8x8xf32> to vector<8x8xbf16>
    %43 = arith.truncf %24 : vector<8x16xf32> to vector<8x16xbf16>
    %cst_26 = arith.constant dense<0.000000e+00> : vector<8x16xf32>
    %44 = tpu.matmul %42, %43, %cst_26 {dimension_numbers = #tpu.dot_dimension_numbers<[1], [0], [0], [1], [0, 0, 1, 1], [], []>} : vector<8x8xbf16>, vector<8x16xbf16>, vector<8x16xf32> -> vector<8x16xf32>
    %45 = arith.truncf %44 : vector<8x16xf32> to vector<8x16xbf16>
    %c0_27 = arith.constant 0 : index
    %c0_28 = arith.constant 0 : index
    %c0_29 = arith.constant 0 : index
    %46 = vector.load %arg5[%c0_27, %c0_28, %c0_29] : memref<2x16x32xbf16, #tpu.memory_space<vmem>>, vector<1x16x32xbf16>
    %47 = vector.shape_cast %46 : vector<1x16x32xbf16> to vector<16x32xbf16>
    %cst_30 = arith.constant dense<0.000000e+00> : vector<8x32xf32>
    %48 = tpu.matmul %45, %47, %cst_30 {dimension_numbers = #tpu.dot_dimension_numbers<[1], [0], [0], [1], [0, 0, 1, 1], [], []>} : vector<8x16xbf16>, vector<16x32xbf16>, vector<8x32xf32> -> vector<8x32xf32>
    %c1 = arith.constant 1 : index
    %c0_31 = arith.constant 0 : index
    %c0_32 = arith.constant 0 : index
    %49 = vector.load %arg3[%c1, %c0_31, %c0_32] : memref<6x32x16xbf16, #tpu.memory_space<vmem>>, vector<1x32x16xbf16>
    %50 = vector.shape_cast %49 : vector<1x32x16xbf16> to vector<32x16xbf16>
    %cst_33 = arith.constant dense<0.000000e+00> : vector<8x16xf32>
    %51 = tpu.matmul %1, %50, %cst_33 {dimension_numbers = #tpu.dot_dimension_numbers<[1], [0], [0], [1], [0, 0, 1, 1], [], []>} : vector<8x32xbf16>, vector<32x16xbf16>, vector<8x16xf32> -> vector<8x16xf32>
    %c1_34 = arith.constant 1 : index
    %c0_35 = arith.constant 0 : index
    %c0_36 = arith.constant 0 : index
    %52 = vector.load %arg4[%c1_34, %c0_35, %c0_36] : memref<6x1x16xf32, #tpu.memory_space<vmem>>, vector<1x1x16xf32>
    %53 = vector.shape_cast %52 : vector<1x1x16xf32> to vector<1x16xf32>
    %54 = vector.broadcast %53 : vector<1x16xf32> to vector<8x16xf32>
    %55 = arith.addf %51, %54 : vector<8x16xf32>
    %c3 = arith.constant 3 : index
    %c0_37 = arith.constant 0 : index
    %c0_38 = arith.constant 0 : index
    %56 = vector.load %arg3[%c3, %c0_37, %c0_38] : memref<6x32x16xbf16, #tpu.memory_space<vmem>>, vector<1x32x16xbf16>
    %57 = vector.shape_cast %56 : vector<1x32x16xbf16> to vector<32x16xbf16>
    %cst_39 = arith.constant dense<0.000000e+00> : vector<8x16xf32>
    %58 = tpu.matmul %1, %57, %cst_39 {dimension_numbers = #tpu.dot_dimension_numbers<[1], [0], [0], [1], [0, 0, 1, 1], [], []>} : vector<8x32xbf16>, vector<32x16xbf16>, vector<8x16xf32> -> vector<8x16xf32>
    %c3_40 = arith.constant 3 : index
    %c0_41 = arith.constant 0 : index
    %c0_42 = arith.constant 0 : index
    %59 = vector.load %arg4[%c3_40, %c0_41, %c0_42] : memref<6x1x16xf32, #tpu.memory_space<vmem>>, vector<1x1x16xf32>
    %60 = vector.shape_cast %59 : vector<1x1x16xf32> to vector<1x16xf32>
    %61 = vector.broadcast %60 : vector<1x16xf32> to vector<8x16xf32>
    %62 = arith.addf %58, %61 : vector<8x16xf32>
    %c5 = arith.constant 5 : index
    %c0_43 = arith.constant 0 : index
    %c0_44 = arith.constant 0 : index
    %63 = vector.load %arg3[%c5, %c0_43, %c0_44] : memref<6x32x16xbf16, #tpu.memory_space<vmem>>, vector<1x32x16xbf16>
    %64 = vector.shape_cast %63 : vector<1x32x16xbf16> to vector<32x16xbf16>
    %cst_45 = arith.constant dense<0.000000e+00> : vector<8x16xf32>
    %65 = tpu.matmul %1, %64, %cst_45 {dimension_numbers = #tpu.dot_dimension_numbers<[1], [0], [0], [1], [0, 0, 1, 1], [], []>} : vector<8x32xbf16>, vector<32x16xbf16>, vector<8x16xf32> -> vector<8x16xf32>
    %c5_46 = arith.constant 5 : index
    %c0_47 = arith.constant 0 : index
    %c0_48 = arith.constant 0 : index
    %66 = vector.load %arg4[%c5_46, %c0_47, %c0_48] : memref<6x1x16xf32, #tpu.memory_space<vmem>>, vector<1x1x16xf32>
    %67 = vector.shape_cast %66 : vector<1x1x16xf32> to vector<1x16xf32>
    %68 = vector.broadcast %67 : vector<1x16xf32> to vector<8x16xf32>
    %69 = arith.addf %65, %68 : vector<8x16xf32>
    %70 = arith.truncf %55 : vector<8x16xf32> to vector<8x16xbf16>
    %71 = arith.truncf %62 : vector<8x16xf32> to vector<8x16xbf16>
    %cst_49 = arith.constant dense<0.000000e+00> : vector<8x8xf32>
    %72 = tpu.matmul %70, %71, %cst_49 {dimension_numbers = #tpu.dot_dimension_numbers<[1], [1], [0], [0], [0, 0, 1, 0], [], []>} : vector<8x16xbf16>, vector<8x16xbf16>, vector<8x8xf32> -> vector<8x8xf32>
    %cst_50 = arith.constant 2.500000e-01 : f32
    %73 = vector.broadcast %cst_50 : f32 to vector<8x8xf32>
    %74 = arith.mulf %72, %73 : vector<8x8xf32>
    %75 = vector.broadcast %3 : vector<1x8xf32> to vector<8x8xf32>
    %76 = arith.addf %74, %75 : vector<8x8xf32>
    %cst_51 = arith.constant dense<0xFF800000> : vector<8xf32>
    %77 = vector.multi_reduction <maximumf>, %76, %cst_51 [1] : vector<8x8xf32> to vector<8xf32>
    %78 = vector.shape_cast %77 : vector<8xf32> to vector<8x1xf32>
    %79 = vector.broadcast %78 : vector<8x1xf32> to vector<8x8xf32>
    %80 = arith.subf %76, %79 : vector<8x8xf32>
    %81 = math.exp %80 : vector<8x8xf32>
    %cst_52 = arith.constant dense<0.000000e+00> : vector<8xf32>
    %82 = vector.multi_reduction <add>, %81, %cst_52 [1] : vector<8x8xf32> to vector<8xf32>
    %83 = vector.shape_cast %82 : vector<8xf32> to vector<8x1xf32>
    %84 = tpu.reciprocal %83 {approx = true} : vector<8x1xf32> -> vector<8x1xf32>
    %85 = vector.broadcast %84 : vector<8x1xf32> to vector<8x8xf32>
    %86 = arith.mulf %81, %85 : vector<8x8xf32>
    %87 = arith.truncf %86 : vector<8x8xf32> to vector<8x8xbf16>
    %88 = arith.truncf %69 : vector<8x16xf32> to vector<8x16xbf16>
    %cst_53 = arith.constant dense<0.000000e+00> : vector<8x16xf32>
    %89 = tpu.matmul %87, %88, %cst_53 {dimension_numbers = #tpu.dot_dimension_numbers<[1], [0], [0], [1], [0, 0, 1, 1], [], []>} : vector<8x8xbf16>, vector<8x16xbf16>, vector<8x16xf32> -> vector<8x16xf32>
    %90 = arith.truncf %89 : vector<8x16xf32> to vector<8x16xbf16>
    %c1_54 = arith.constant 1 : index
    %c0_55 = arith.constant 0 : index
    %c0_56 = arith.constant 0 : index
    %91 = vector.load %arg5[%c1_54, %c0_55, %c0_56] : memref<2x16x32xbf16, #tpu.memory_space<vmem>>, vector<1x16x32xbf16>
    %92 = vector.shape_cast %91 : vector<1x16x32xbf16> to vector<16x32xbf16>
    %cst_57 = arith.constant dense<0.000000e+00> : vector<8x32xf32>
    %93 = tpu.matmul %90, %92, %cst_57 {dimension_numbers = #tpu.dot_dimension_numbers<[1], [0], [0], [1], [0, 0, 1, 1], [], []>} : vector<8x16xbf16>, vector<16x32xbf16>, vector<8x32xf32> -> vector<8x32xf32>
    %94 = arith.addf %48, %93 : vector<8x32xf32>
    %c0_58 = arith.constant 0 : index
    %c0_59 = arith.constant 0 : index
    %95 = vector.load %arg6[%c0_58, %c0_59] : memref<1x32xf32, #tpu.memory_space<vmem>>, vector<1x32xf32>
    %96 = vector.broadcast %95 : vector<1x32xf32> to vector<8x32xf32>
    %97 = arith.addf %94, %96 : vector<8x32xf32>
    %98 = arith.addf %97, %0 : vector<8x32xf32>
    %c0_60 = arith.constant 0 : index
    %c0_61 = arith.constant 0 : index
    %99 = vector.load %arg7[%c0_60, %c0_61] : memref<1x32xf32, #tpu.memory_space<vmem>>, vector<1x32xf32>
    %c0_62 = arith.constant 0 : index
    %c0_63 = arith.constant 0 : index
    %100 = vector.load %arg8[%c0_62, %c0_63] : memref<1x32xf32, #tpu.memory_space<vmem>>, vector<1x32xf32>
    %cst_64 = arith.constant dense<0.000000e+00> : vector<8xf32>
    %101 = vector.multi_reduction <add>, %98, %cst_64 [1] : vector<8x32xf32> to vector<8xf32>
    %102 = vector.shape_cast %101 : vector<8xf32> to vector<8x1xf32>
    %cst_65 = arith.constant 3.200000e+01 : f32
    %103 = vector.broadcast %cst_65 : f32 to vector<8x1xf32>
    %104 = arith.divf %102, %103 : vector<8x1xf32>
    %105 = vector.broadcast %104 : vector<8x1xf32> to vector<8x32xf32>
    %106 = arith.subf %98, %105 : vector<8x32xf32>
    %107 = arith.mulf %106, %106 : vector<8x32xf32>
    %cst_66 = arith.constant dense<0.000000e+00> : vector<8xf32>
    %108 = vector.multi_reduction <add>, %107, %cst_66 [1] : vector<8x32xf32> to vector<8xf32>
    %109 = vector.shape_cast %108 : vector<8xf32> to vector<8x1xf32>
    %cst_67 = arith.constant 3.200000e+01 : f32
    %110 = vector.broadcast %cst_67 : f32 to vector<8x1xf32>
    %111 = arith.divf %109, %110 : vector<8x1xf32>
    %cst_68 = arith.constant 9.99999996E-13 : f32
    %112 = vector.broadcast %cst_68 : f32 to vector<8x1xf32>
    %113 = arith.addf %111, %112 : vector<8x1xf32>
    %114 = math.rsqrt %113 : vector<8x1xf32>
    %115 = vector.broadcast %114 : vector<8x1xf32> to vector<8x32xf32>
    %116 = arith.mulf %106, %115 : vector<8x32xf32>
    %117 = vector.broadcast %99 : vector<1x32xf32> to vector<8x32xf32>
    %118 = arith.mulf %116, %117 : vector<8x32xf32>
    %119 = vector.broadcast %100 : vector<1x32xf32> to vector<8x32xf32>
    %120 = arith.addf %118, %119 : vector<8x32xf32>
    %121 = arith.truncf %120 : vector<8x32xf32> to vector<8x32xbf16>
    %c0_69 = arith.constant 0 : index
    %c0_70 = arith.constant 0 : index
    %122 = vector.load %arg9[%c0_69, %c0_70] : memref<32x128xbf16, #tpu.memory_space<vmem>>, vector<32x128xbf16>
    %cst_71 = arith.constant dense<0.000000e+00> : vector<8x128xf32>
    %123 = tpu.matmul %121, %122, %cst_71 {dimension_numbers = #tpu.dot_dimension_numbers<[1], [0], [0], [1], [0, 0, 1, 1], [], []>} : vector<8x32xbf16>, vector<32x128xbf16>, vector<8x128xf32> -> vector<8x128xf32>
    %c0_72 = arith.constant 0 : index
    %c0_73 = arith.constant 0 : index
    %124 = vector.load %arg10[%c0_72, %c0_73] : memref<1x128xf32, #tpu.memory_space<vmem>>, vector<1x128xf32>
    %125 = vector.broadcast %124 : vector<1x128xf32> to vector<8x128xf32>
    %126 = arith.addf %123, %125 : vector<8x128xf32>
    %cst_74 = arith.constant 5.000000e-01 : f32
    %127 = vector.broadcast %cst_74 : f32 to vector<8x128xf32>
    %128 = arith.mulf %127, %126 : vector<8x128xf32>
    %cst_75 = arith.constant 4.471500e-02 : f32
    %129 = vector.broadcast %cst_75 : f32 to vector<8x128xf32>
    %130 = arith.mulf %129, %126 : vector<8x128xf32>
    %131 = arith.mulf %130, %126 : vector<8x128xf32>
    %132 = arith.mulf %131, %126 : vector<8x128xf32>
    %133 = arith.addf %126, %132 : vector<8x128xf32>
    %cst_76 = arith.constant 0.797884583 : f32
    %134 = vector.broadcast %cst_76 : f32 to vector<8x128xf32>
    %135 = arith.mulf %134, %133 : vector<8x128xf32>
    %136 = math.tanh %135 : vector<8x128xf32>
    %cst_77 = arith.constant 1.000000e+00 : f32
    %137 = vector.broadcast %cst_77 : f32 to vector<8x128xf32>
    %138 = arith.addf %137, %136 : vector<8x128xf32>
    %139 = arith.mulf %128, %138 : vector<8x128xf32>
    %140 = arith.truncf %139 : vector<8x128xf32> to vector<8x128xbf16>
    %c0_78 = arith.constant 0 : index
    %c0_79 = arith.constant 0 : index
    %141 = vector.load %arg11[%c0_78, %c0_79] : memref<128x32xbf16, #tpu.memory_space<vmem>>, vector<128x32xbf16>
    %cst_80 = arith.constant dense<0.000000e+00> : vector<8x32xf32>
    %142 = tpu.matmul %140, %141, %cst_80 {dimension_numbers = #tpu.dot_dimension_numbers<[1], [0], [0], [1], [0, 0, 1, 1], [], []>} : vector<8x128xbf16>, vector<128x32xbf16>, vector<8x32xf32> -> vector<8x32xf32>
    %c0_81 = arith.constant 0 : index
    %c0_82 = arith.constant 0 : index
    %143 = vector.load %arg12[%c0_81, %c0_82] : memref<1x32xf32, #tpu.memory_space<vmem>>, vector<1x32xf32>
    %144 = vector.broadcast %143 : vector<1x32xf32> to vector<8x32xf32>
    %145 = arith.addf %142, %144 : vector<8x32xf32>
    %146 = arith.addf %145, %120 : vector<8x32xf32>
    %c0_83 = arith.constant 0 : index
    %c0_84 = arith.constant 0 : index
    %147 = vector.load %arg13[%c0_83, %c0_84] : memref<1x32xf32, #tpu.memory_space<vmem>>, vector<1x32xf32>
    %c0_85 = arith.constant 0 : index
    %c0_86 = arith.constant 0 : index
    %148 = vector.load %arg14[%c0_85, %c0_86] : memref<1x32xf32, #tpu.memory_space<vmem>>, vector<1x32xf32>
    %cst_87 = arith.constant dense<0.000000e+00> : vector<8xf32>
    %149 = vector.multi_reduction <add>, %146, %cst_87 [1] : vector<8x32xf32> to vector<8xf32>
    %150 = vector.shape_cast %149 : vector<8xf32> to vector<8x1xf32>
    %cst_88 = arith.constant 3.200000e+01 : f32
    %151 = vector.broadcast %cst_88 : f32 to vector<8x1xf32>
    %152 = arith.divf %150, %151 : vector<8x1xf32>
    %153 = vector.broadcast %152 : vector<8x1xf32> to vector<8x32xf32>
    %154 = arith.subf %146, %153 : vector<8x32xf32>
    %155 = arith.mulf %154, %154 : vector<8x32xf32>
    %cst_89 = arith.constant dense<0.000000e+00> : vector<8xf32>
    %156 = vector.multi_reduction <add>, %155, %cst_89 [1] : vector<8x32xf32> to vector<8xf32>
    %157 = vector.shape_cast %156 : vector<8xf32> to vector<8x1xf32>
    %cst_90 = arith.constant 3.200000e+01 : f32
    %158 = vector.broadcast %cst_90 : f32 to vector<8x1xf32>
    %159 = arith.divf %157, %158 : vector<8x1xf32>
    %cst_91 = arith.constant 9.99999996E-13 : f32
    %160 = vector.broadcast %cst_91 : f32 to vector<8x1xf32>
    %161 = arith.addf %159, %160 : vector<8x1xf32>
    %162 = math.rsqrt %161 : vector<8x1xf32>
    %163 = vector.broadcast %162 : vector<8x1xf32> to vector<8x32xf32>
    %164 = arith.mulf %154, %163 : vector<8x32xf32>
    %165 = vector.broadcast %147 : vector<1x32xf32> to vector<8x32xf32>
    %166 = arith.mulf %164, %165 : vector<8x32xf32>
    %167 = vector.broadcast %148 : vector<1x32xf32> to vector<8x32xf32>
    %168 = arith.addf %166, %167 : vector<8x32xf32>
    %c0_92 = arith.constant 0 : index
    %c0_93 = arith.constant 0 : index
    %169 = vector.load %arg15[%c0_92, %c0_93] : memref<8x32xf32, #tpu.memory_space<vmem>>, vector<8x32xf32>
    tpu.vector_store %arg15[%c0_92, %c0_93], %168 {strides = array<i32>} : memref<8x32xf32, #tpu.memory_space<vmem>>, vector<8x32xf32>,
    return
  }
  func.func @transform_0(%arg0: i32) -> (i32, i32) {
    %c0_i32 = arith.constant 0 : i32
    %c0_i32_0 = arith.constant 0 : i32
    return %arg0, %c0_i32 : i32, i32
  }
  func.func @transform_1(%arg0: i32) -> (i32, i32, i32) {
    %c0_i32 = arith.constant 0 : i32
    %c0_i32_0 = arith.constant 0 : i32
    %c0_i32_1 = arith.constant 0 : i32
    return %arg0, %c0_i32, %c0_i32_0 : i32, i32, i32
  }
  func.func @transform_2(%arg0: i32) -> (i32, i32, i32) {
    %c0_i32 = arith.constant 0 : i32
    %c0_i32_0 = arith.constant 0 : i32
    %c0_i32_1 = arith.constant 0 : i32
    %c0_i32_2 = arith.constant 0 : i32
    return %c0_i32, %c0_i32_0, %c0_i32_1 : i32, i32, i32
  }
  func.func @transform_3(%arg0: i32) -> (i32, i32, i32) {
    %c0_i32 = arith.constant 0 : i32
    %c0_i32_0 = arith.constant 0 : i32
    %c0_i32_1 = arith.constant 0 : i32
    %c0_i32_2 = arith.constant 0 : i32
    return %c0_i32, %c0_i32_0, %c0_i32_1 : i32, i32, i32
  }
  func.func @transform_4(%arg0: i32) -> (i32, i32, i32) {
    %c0_i32 = arith.constant 0 : i32
    %c0_i32_0 = arith.constant 0 : i32
    %c0_i32_1 = arith.constant 0 : i32
    %c0_i32_2 = arith.constant 0 : i32
    return %c0_i32, %c0_i32_0, %c0_i32_1 : i32, i32, i32
  }
  func.func @transform_5(%arg0: i32) -> (i32, i32) {
    %c0_i32 = arith.constant 0 : i32
    %c0_i32_0 = arith.constant 0 : i32
    %c0_i32_1 = arith.constant 0 : i32
    return %c0_i32, %c0_i32_0 : i32, i32
  }
  func.func @transform_6(%arg0: i32) -> (i32, i32) {
    %c0_i32 = arith.constant 0 : i32
    %c0_i32_0 = arith.constant 0 : i32
    %c0_i32_1 = arith.constant 0 : i32
    return %c0_i32, %c0_i32_0 : i32, i32
  }
  func.func @transform_7(%arg0: i32) -> (i32, i32) {
    %c0_i32 = arith.constant 0 : i32
    %c0_i32_0 = arith.constant 0 : i32
    %c0_i32_1 = arith.constant 0 : i32
    return %c0_i32, %c0_i32_0 : i32, i32
  }
  func.func @transform_8(%arg0: i32) -> (i32, i32) {
    %c0_i32 = arith.constant 0 : i32
    %c0_i32_0 = arith.constant 0 : i32
    %c0_i32_1 = arith.constant 0 : i32
    return %c0_i32, %c0_i32_0 : i32, i32
  }
  func.func @transform_9(%arg0: i32) -> (i32, i32) {
    %c0_i32 = arith.constant 0 : i32
    %c0_i32_0 = arith.constant 0 : i32
    %c0_i32_1 = arith.constant 0 : i32
    return %c0_i32, %c0_i32_0 : i32, i32
  }
  func.func @transform_10(%arg0: i32) -> (i32, i32) {
    %c0_i32 = arith.constant 0 : i32
    %c0_i32_0 = arith.constant 0 : i32
    %c0_i32_1 = arith.constant 0 : i32
    return %c0_i32, %c0_i32_0 : i32, i32
  }
  func.func @transform_11(%arg0: i32) -> (i32, i32) {
    %c0_i32 = arith.constant 0 : i32
    %c0_i32_0 = arith.constant 0 : i32
    %c0_i32_1 = arith.constant 0 : i32
    return %c0_i32, %c0_i32_0 : i32, i32
  }
  func.func @transform_12(%arg0: i32) -> (i32, i32) {
    %c0_i32 = arith.constant 0 : i32
    %c0_i32_0 = arith.constant 0 : i32
    %c0_i32_1 = arith.constant 0 : i32
    return %c0_i32, %c0_i32_0 : i32, i32
  }
  func.func @transform_13(%arg0: i32) -> (i32, i32) {
    %c0_i32 = arith.constant 0 : i32
    %c0_i32_0 = arith.constant 0 : i32
    %c0_i32_1 = arith.constant 0 : i32
    return %c0_i32, %c0_i32_0 : i32, i32
  }
  func.func @transform_14(%arg0: i32) -> (i32, i32) {
    %c0_i32 = arith.constant 0 : i32
    %c0_i32_0 = arith.constant 0 : i32
    return %arg0, %c0_i32 : i32, i32
  }
}

</mosaic_0001>

<llo_original>
// kernel: bert_forward.4
$region0: #{bert_forward.4}
  #allocation0 [shape = 'u32[]', space=smem, size = 0x4, offset = 0x4, fixed_abs, tag = 'smem constant byte address 0x4 - core index']
  #allocation1 [shape = 'u32[72,128]{1,0:T(1,128)}', space=vmem, size = 0x9000, scoped, tag = 'internal scratch']
  %s0 = inlined_call_operand.vmem [shape: f32[16,32], index: 0, kind: input, shape index: {}]
  %s1 = inlined_call_operand.vmem [shape: f32[1,32], index: 1, kind: input, shape index: {}]
  %s2 = inlined_call_operand.vmem [shape: f32[1,32], index: 2, kind: input, shape index: {}]
  %s3 = inlined_call_operand.vmem [shape: f32[16,32], index: 3, kind: output, shape index: {}]
  %s4 = sld [smem:[#allocation0]]
  $region45: #{bert_forward.4} parent=0
    _
  %s6 = ssub.s32 1, %s4
  %s7 = scalar_select 0, %s6, %s4
  loop: start=0, step=1, limit=4
  $region2: #{bert_forward.4} parent=0 // loop_pre_header
    _
  $region3: #{bert_forward.4} parent=0 // loop_header
    %s9 = sphi 0, %s13
    %p10 = scmp.ge.s32.totalorder %s9, 4
    %s19 = sphi 0, %s21
    %s22 = sphi 0, %s19
    %s23 = sphi 0, %s22
    %s39 = sphi 0, %s23
    %s43 = sphi 0, %s43
    %s45 = sphi 0, %s43
    %s46 = sphi 0, %s45
    %s60 = sphi 0, %s46
    %s64 = sphi 0, %s64
    %s66 = sphi 0, %s64
    %s67 = sphi 0, %s66
    %s81 = sphi 0, %s67
    %s87 = sphi 0, %s89
    %s90 = sphi 0, %s87
    %s91 = sphi 0, %s90
    %s107 = sphi 0, %s91
  $region4: #{bert_forward.4} parent=0 // loop_header_branch
    %12 = sbr.rel (%p10) target = $region8
  $region5: #{bert_forward.4} parent=0 // loop_body
    %s14 = ssub.s32 %s9, 1
    %s15 = ssub.s32 %s9, 2
    %s16 = sadd.s32 %s9, 1
    %s17 = ssub.s32 %s9, %s16
    %p18 = scmp.eq.s32.totalorder %s17, 0
    %s20 = sadd.s32 %s19, 1
    %s21 = scalar_select %p18, %s19, %s20
    %p24 = pneg %p18
    %p25 = scmp.eq.s32.totalorder %s9, 1
    %p26 = por %p24, %p25
    %p27 = scmp.ne.s32.totalorder %s19, %s22
    %p28 = scmp.eq.s32.totalorder %s9, 0
    %p29 = por %p27, %p28
    %p30 = scmp.ne.s32.totalorder %s19, %s22
    %p31 = scmp.eq.s32.totalorder %s14, 1
    %p32 = por %p30, %p31
    %p33 = scmp.ne.s32.totalorder %s22, %s23
    %p34 = scmp.eq.s32.totalorder %s14, 0
    %p35 = por %p33, %p34
    %p36 = scmp.ne.s32.totalorder %s22, %s23
    %p37 = scmp.eq.s32.totalorder %s15, 1
    %p38 = por %p36, %p37
    %p40 = scmp.ne.s32.totalorder %s23, %s39
    %p41 = scmp.eq.s32.totalorder %s15, 0
    %p42 = por %p40, %p41
    %s44 = sadd.s32 %s43, 1
    %p47 = scmp.eq.s32.totalorder %s9, 1
    %p48 = scmp.ne.s32.totalorder %s43, %s45
    %p49 = scmp.eq.s32.totalorder %s9, 0
    %p50 = por %p48, %p49
    %p51 = scmp.ne.s32.totalorder %s43, %s45
    %p52 = scmp.eq.s32.totalorder %s14, 1
    %p53 = por %p51, %p52
    %p54 = scmp.ne.s32.totalorder %s45, %s46
    %p55 = scmp.eq.s32.totalorder %s14, 0
    %p56 = por %p54, %p55
    %p57 = scmp.ne.s32.totalorder %s45, %s46
    %p58 = scmp.eq.s32.totalorder %s15, 1
    %p59 = por %p57, %p58
    %p61 = scmp.ne.s32.totalorder %s46, %s60
    %p62 = scmp.eq.s32.totalorder %s15, 0
    %p63 = por %p61, %p62
    %s65 = sadd.s32 %s64, 1
    %p68 = scmp.eq.s32.totalorder %s9, 1
    %p69 = scmp.ne.s32.totalorder %s64, %s66
    %p70 = scmp.eq.s32.totalorder %s9, 0
    %p71 = por %p69, %p70
    %p72 = scmp.ne.s32.totalorder %s64, %s66
    %p73 = scmp.eq.s32.totalorder %s14, 1
    %p74 = por %p72, %p73
    %p75 = scmp.ne.s32.totalorder %s66, %s67
    %p76 = scmp.eq.s32.totalorder %s14, 0
    %p77 = por %p75, %p76
    %p78 = scmp.ne.s32.totalorder %s66, %s67
    %p79 = scmp.eq.s32.totalorder %s15, 1
    %p80 = por %p78, %p79
    %p82 = scmp.ne.s32.totalorder %s67, %s81
    %p83 = scmp.eq.s32.totalorder %s15, 0
    %p84 = por %p82, %p83
    %s85 = ssub.s32 %s9, %s16
    %p86 = scmp.eq.s32.totalorder %s85, 0
    %s88 = sadd.s32 %s87, 1
    %s89 = scalar_select %p86, %s87, %s88
    %p92 = pneg %p86
    %p93 = scmp.eq.s32.totalorder %s9, 1
    %p94 = por %p92, %p93
    %p95 = scmp.ne.s32.totalorder %s87, %s90
    %p96 = scmp.eq.s32.totalorder %s9, 0
    %p97 = por %p95, %p96
    %p98 = scmp.ne.s32.totalorder %s87, %s90
    %p99 = scmp.eq.s32.totalorder %s14, 1
    %p100 = por %p98, %p99
    %p101 = scmp.ne.s32.totalorder %s90, %s91
    %p102 = scmp.eq.s32.totalorder %s14, 0
    %p103 = por %p101, %p102
    %p104 = scmp.ne.s32.totalorder %s90, %s91
    %p105 = scmp.eq.s32.totalorder %s15, 1
    %p106 = por %p104, %p105
    %p108 = scmp.ne.s32.totalorder %s91, %s107
    %p109 = scmp.eq.s32.totalorder %s15, 0
    %p110 = por %p108, %p109
    %p111 = scmp.le.s32.totalorder 1, %s9
    %p112 = scmp.lt.s32.totalorder %s9, 3
    %p113 = pnand %p111, %p112
    %p114 = pneg %p113
    // Predicated region
    $region9: #{bert_forward.4} parent=5 // pred_check
      _
    $region10: #{bert_forward.4} parent=5 // pred_check_branch
      %116 = sbr.rel (%p113) target = $region12
    $region11: #{bert_forward.4} parent=5 // pred_region
      %s117 = ssub.s32 %s9, 1
      // Predicated region
      $region13: #{bert_forward.4} parent=11 // pred_check
        %p118 = pneg %p56
      $region14: #{bert_forward.4} parent=11 // pred_check_branch
        %120 = sbr.rel (%p118) target = $region16
      $region15: #{bert_forward.4} parent=11 // pred_region
        _
      $region16: #{bert_forward.4} parent=11 // pred_fallthru
        _
      // Predicated region
      $region17: #{bert_forward.4} parent=11 // pred_check
        %p121 = pneg %p77
      $region18: #{bert_forward.4} parent=11 // pred_check_branch
        %123 = sbr.rel (%p121) target = $region20
      $region19: #{bert_forward.4} parent=11 // pred_region
        _
      $region20: #{bert_forward.4} parent=11 // pred_fallthru
        _
    $region12: #{bert_forward.4} parent=5 // pred_fallthru
      _
    %p124 = scmp.lt.s32.totalorder %s9, 2
    // Predicated region
    $region21: #{bert_forward.4} parent=5 // pred_check
      %p125 = pneg %p124
    $region22: #{bert_forward.4} parent=5 // pred_check_branch
      %127 = sbr.rel (%p125) target = $region24
    $region23: #{bert_forward.4} parent=5 // pred_region
      // Predicated region
      $region25: #{bert_forward.4} parent=23 // pred_check
        %p128 = pneg %p29
      $region26: #{bert_forward.4} parent=23 // pred_check_branch
        %130 = sbr.rel (%p128) target = $region28
      $region27: #{bert_forward.4} parent=23 // pred_region
        %p131 = scmp.lt.s32.totalorder %s9, 1
        %s132 = scalar_select %p131, %s9, 1
        %s133 = smul.addr %s132, 8
        %s134 = scalar_lea.vmem %s0, %s133
      $region28: #{bert_forward.4} parent=23 // pred_fallthru
        _
    $region24: #{bert_forward.4} parent=5 // pred_fallthru
      _
    %p135 = scmp.le.s32.totalorder 1, %s9
    %p136 = scmp.lt.s32.totalorder %s9, 3
    %p137 = pnand %p135, %p136
    %p138 = pneg %p137
    // Predicated region
    $region29: #{bert_forward.4} parent=5 // pred_check
      _
    $region30: #{bert_forward.4} parent=5 // pred_check_branch
      %140 = sbr.rel (%p137) target = $region32
    $region31: #{bert_forward.4} parent=5 // pred_region
      %s141 = ssub.s32 %s9, 1
      %p142 = scmp.lt.s32.totalorder %s14, 1
      %s143 = scalar_select %p142, %s14, 1
      %s144 = smul.addr %s143, 8
      %s145 = scalar_lea.vmem %s0, %s144
      %p146 = pneg %p35
      %p147 = pneg %p32
      %p148 = pneg %p56
      %p149 = pneg %p53
      %p150 = pneg %p77
      %p151 = pneg %p74
      %p152 = pneg %p103
      %p153 = pneg %p100
      %p154 = scmp.lt.s32.totalorder %s14, 1
      %s155 = scalar_select %p154, %s14, 1
      %s156 = smul.addr %s155, 8
      %s157 = scalar_lea.vmem %s3, %s156
      %p158 = scmp.lt.s32.totalorder %s14, 1
      %s159 = scalar_select %p158, %s14, 1
      %s160 = smul.addr %s159, 8
      %s161 = scalar_lea.vmem %s0, %s160
      %p162 = scmp.lt.s32.totalorder %s14, 1
      %s163 = scalar_select %p162, %s14, 1
      %s164 = smul.addr %s163, 8
      %s165 = scalar_lea.vmem %s3, %s164
      %v166 = vld [vmem:[%s161] sm:$0xff]
      %v167 = vld [vmem:[%s1] sm:$0x1]
      %v168 = vld [vmem:[%s2] sm:$0x1]
      %vm169 = vcmask 261120
      %v170 = vsel %vm169, %v166, 0.0
      %171 = vadd.xlane.f32.xlu0 %v170
      %v172 = vpop.xlane.xlu0 %171
      %v173 = vrcp.pop 32.0
      %v174 = vmul.f32 32.0, %v173
      %v175 = vsub.f32 1.0, %v174
      %v176 = vmul.f32 %v173, %v175
      %v177 = vadd.f32 %v173, %v176
      %vm178 = vweird.f32 %v173
      %v179 = vsel %vm178, %v173, %v177
      %v180 = vmul.f32 %v172, %v179
      %v181 = vsub.f32 %v166, %v180
      %v182 = vmul.f32 %v181, %v181
      %v183 = vsel %vm169, %v182, 0.0
      %184 = vadd.xlane.f32.xlu0 %v183
      %v185 = vpop.xlane.xlu0 %184
      %v186 = vmul.f32 %v185, %v179
      %v187 = vadd.f32 %v186, 1e-12
      %v188 = vrsqrt.pop %v187
      %v189 = vmul.f32 %v188, %v187
      %v190 = vmul.f32 %v189, %v188
      %v191 = vmul.f32 0.5, %v190
      %v192 = vsub.f32 1.5, %v191
      %v193 = vmul.f32 %v188, %v192
      %vm194 = vweird.f32 %v187
      %vm195 = vweird.f32 %v188
      %vm196 = vmor %vm194, %vm195
      %v197 = vsel %vm196, %v188, %v193
      %v198 = vmul.f32 %v181, %v197
      %v200 = vperm.slane %v167, 0
      %v202 = vmul.f32 %v198, %v200
      %v204 = vperm.slane %v168, 0
      %v206 = vadd.f32 %v202, %v204
      %207 = vst.msk [vmem:[%s165] sm:$0xff] %vm169, %v206
      %p208 = scmp.lt.s32.totalorder %s14, 1
      %s209 = scalar_select %p208, %s14, 1
      %s210 = smul.addr %s209, 8
      %s211 = scalar_lea.vmem %s3, %s210
      // Predicated region
      $region33: #{bert_forward.4} parent=31 // pred_check
        %p212 = pneg %p100
      $region34: #{bert_forward.4} parent=31 // pred_check_branch
        %214 = sbr.rel (%p212) target = $region36
      $region35: #{bert_forward.4} parent=31 // pred_region
        _
      $region36: #{bert_forward.4} parent=31 // pred_fallthru
        _
    $region32: #{bert_forward.4} parent=5 // pred_fallthru
      _
    %p215 = scmp.le.s32.totalorder 2, %s9
    // Predicated region
    $region37: #{bert_forward.4} parent=5 // pred_check
      %p216 = pneg %p215
    $region38: #{bert_forward.4} parent=5 // pred_check_branch
      %218 = sbr.rel (%p216) target = $region40
    $region39: #{bert_forward.4} parent=5 // pred_region
      %s219 = ssub.s32 %s9, 2
      // Predicated region
      $region41: #{bert_forward.4} parent=39 // pred_check
        %p220 = pneg %p106
      $region42: #{bert_forward.4} parent=39 // pred_check_branch
        %222 = sbr.rel (%p220) target = $region44
      $region43: #{bert_forward.4} parent=39 // pred_region
        %p223 = scmp.lt.s32.totalorder %s15, 1
        %s224 = scalar_select %p223, %s15, 1
        %s225 = smul.addr %s224, 8
        %s226 = scalar_lea.vmem %s3, %s225
      $region44: #{bert_forward.4} parent=39 // pred_fallthru
        _
    $region40: #{bert_forward.4} parent=5 // pred_fallthru
      _
  $region6: #{bert_forward.4} parent=0 // loop_footer
    %s13 = sadd.s32 1, %s9
  $region7: #{bert_forward.4} parent=0 // loop_footer_branch
    %8 = sbr.rel target = $region3
  $region8: #{bert_forward.4} parent=0 // loop_exit
    _

// kernel: bert_forward.7
$region0: #{bert_forward.7}
  #allocation0 [shape = 'u32[]', space=smem, size = 0x4, offset = 0x4, fixed_abs, tag = 'smem constant byte address 0x4 - core index']
  #allocation1 [shape = 'u32[72,128]{1,0:T(1,128)}', space=vmem, size = 0x9000, scoped, tag = 'internal scratch']
  %s0 = inlined_call_operand.vmem [shape: f32[16,32], index: 0, kind: input, shape index: {}]
  %s1 = inlined_call_operand.vmem [shape: bf16[32,4], index: 1, kind: input, shape index: {}]
  %s2 = inlined_call_operand.vmem [shape: f32[1,4], index: 2, kind: input, shape index: {}]
  %s3 = inlined_call_operand.vmem [shape: s32[16,1], index: 3, kind: input, shape index: {}]
  %s4 = inlined_call_operand.vmem [shape: f32[16,4], index: 4, kind: output, shape index: {0}]
  %s5 = inlined_call_operand.hbm [shape: f32[1,1], index: 5, kind: output, shape index: {1}]
  %6 = xla_tuple %s4, %s5
  %s7 = sld [smem:[#allocation0]]
  $region34: #{bert_forward.7} parent=0
    _
  %s9 = ssub.s32 1, %s7
  %s10 = scalar_select 0, %s9, %s7
  $region1: #{bert_forward.7} parent=0
    #allocation2 [shape = 'u8[512]{0}', space=vmem, size = 0x400, scoped, tag = 'output window, operand 1, single buffered']
    #allocation3 [shape = 's32[1]{0}', space=sflag, size = 0x4, scoped, tag = 'scoped memory for bert_forward.7']
    %11 = vsyncpa [#allocation3], 0
    // Predicated region
    $region2: #{bert_forward.7} parent=1 // pred_check
      _
    $region3: #{bert_forward.7} parent=1 // pred_check_branch
      %13 = sbr.rel (0) target = $region5
    $region4: #{bert_forward.7} parent=1 // pred_region
      _
    $region5: #{bert_forward.7} parent=1 // pred_fallthru
      _
    // Predicated region
    $region6: #{bert_forward.7} parent=1 // pred_check
      _
    $region7: #{bert_forward.7} parent=1 // pred_check_branch
      %15 = sbr.rel (0) target = $region9
    $region8: #{bert_forward.7} parent=1 // pred_region
      _
    $region9: #{bert_forward.7} parent=1 // pred_fallthru
      _
    // Predicated region
    $region10: #{bert_forward.7} parent=1 // pred_check
      _
    $region11: #{bert_forward.7} parent=1 // pred_check_branch
      %17 = sbr.rel (0) target = $region13
    $region12: #{bert_forward.7} parent=1 // pred_region
      _
    $region13: #{bert_forward.7} parent=1 // pred_fallthru
      _
    // Predicated region
    $region14: #{bert_forward.7} parent=1 // pred_check
      _
    $region15: #{bert_forward.7} parent=1 // pred_check_branch
      %19 = sbr.rel (0) target = $region17
    $region16: #{bert_forward.7} parent=1 // pred_region
      _
    $region17: #{bert_forward.7} parent=1 // pred_fallthru
      _
    %v21 = vld [vmem:[%s0] sm:$0xff]
    %v22 = vld [vmem:[%s0 + $0x8] sm:$0xff]
    %v23 = vpack.c.bf16 %v22, %v21
    %v24 = vld [vmem:[%s1] sm:$0xf]
    %v25 = vld [vmem:[%s1 + $0x4] sm:$0xf]
    %v26 = vld [vmem:[%s1 + $0x8] sm:$0xf]
    %v27 = vld [vmem:[%s1 + $0xc] sm:$0xf]
    %v28 = vld [vmem:[%s2] sm:$0x1]
    %v30 = vperm.slane %v28, 0
    %v36 = vunpack.c.l.b16 %v24
    %v37 = vunpack.c.l.b16 %v25
    %v38 = vunpack.c.l.b16 %v26
    %v39 = vunpack.c.l.b16 %v27
    %v40 = vpack.c.b16 %v37, %v36
    %v41 = vpack.c.b16 %v39, %v38
    %vm44 = vcmask 261120
    %v46 = vsel %vm44, %v23, 0
    %48 = vmatpush.bf16.msra.mxu0 0
    %49 = vmatpush.bf16.msra.mxu0 0
    %50 = vmatpush.bf16.msra.mxu0 0
    %51 = vmatpush.bf16.msra.mxu0 0
    %52 = vmatpush.bf16.msra.mxu0 0
    %53 = vmatpush.bf16.msra.mxu0 0
    %54 = vmatpush.bf16.msra.mxu0 %v41
    %55 = vmatpush.bf16.msra.mxu0 %v40
    %56 = vmatmul.bf16.gmra.mxu0 %v46
    %v57 = vpop.f32.mrf.mxu0
    %v58 = vadd.f32 %v30, %v57
    %v59 = vpop.f32.mrf.mxu0
    %v60 = vadd.f32 %v30, %v59
    %61 = vdwg.mxu0
    %vm62 = vcmask 31744
    %63 = vst.msk [vmem:[%s4] sm:$0xff] %vm62, %v58
    %64 = vst.msk [vmem:[%s4 + $0x8] sm:$0xff] %vm62, %v60
    %v65 = vld [vmem:[%s3] sm:$0xff]
    %v66 = vld [vmem:[%s3 + $0x8] sm:$0xff]
    %v67 = vsel %vm62, %v58, -inf
    %68 = vmax.xlane.f32.xlu0 %v67
    %v69 = vpop.xlane.xlu0 %68
    %v70 = vsel %vm62, %v60, -inf
    %71 = vmax.xlane.f32.xlu0 %v70
    %v72 = vpop.xlane.xlu0 %71
    %v73 = vsub.f32 %v58, %v69
    %v74 = vsub.f32 %v60, %v72
    %v75 = vmul.f32 %v73, 1.442695
    %v76 = vpow.pop %v75
    %v77 = vmul.f32 %v74, 1.442695
    %v78 = vpow.pop %v77
    %v79 = vsel %vm62, %v76, 0.0
    %80 = vadd.xlane.f32.xlu0 %v79
    %v81 = vpop.xlane.xlu0 %80
    %v82 = vsel %vm62, %v78, 0.0
    %83 = vadd.xlane.f32.xlu0 %v82
    %v84 = vpop.xlane.xlu0 %83
    %v85 = vlog2.pop %v81
    %v86 = vmul.f32 %v85, 0.6931472
    %v87 = vlog2.pop %v84
    %v88 = vmul.f32 %v87, 0.6931472
    %v89 = vadd.f32 %v86, %v69
    %v90 = vadd.f32 %v88, %v72
    %v91 = vlaneseq
    %v92 = vand.u32 %v91, 127
    %93 = vset.pattern.permute.xlu0 0
    %94 = vperm.xlu0 %93, %v65
    %v95 = vpop.permute.xlu0 %94
    %96 = vset.pattern.permute.xlu0 0
    %97 = vperm.xlu0 %96, %v66
    %v98 = vpop.permute.xlu0 %97
    %vm99 = vcmp.eq.s32.totalorder %v92, %v95
    %vm100 = vcmp.eq.s32.totalorder %v92, %v98
    %v101 = vsel %vm99, %v58, 0.0
    %v102 = vsel %vm100, %v60, 0.0
    %v103 = vsel %vm62, %v101, 0.0
    %104 = vadd.xlane.f32.xlu0 %v103
    %v105 = vpop.xlane.xlu0 %104
    %v106 = vsel %vm62, %v102, 0.0
    %107 = vadd.xlane.f32.xlu0 %v106
    %v108 = vpop.xlane.xlu0 %107
    %vm109 = vcmp.ne.s32.totalorder %v65, 4294967196
    %vm110 = vcmp.ne.s32.totalorder %v66, 4294967196
    %v111 = vsel %vm109, 1, 0
    %v112 = vsel %vm110, 1, 0
    %v113 = vcvt.s32.f32 %v111
    %v114 = vcvt.s32.f32 %v112
    %v115 = vsub.f32 %v89, %v105
    %v116 = vsub.f32 %v90, %v108
    %v117 = vmul.f32 %v115, %v113
    %v118 = vmul.f32 %v116, %v114
    %vm119 = vcmask 7168
    %v120 = vsel %vm119, %v117, 0.0
    %v121 = vsel %vm119, %v118, 0.0
    %v122 = vadd.f32 %v120, %v121
    %v123 = vrot.slane %v122, 4
    %v124 = vadd.f32 %v122, %v123
    %v125 = vrot.slane %v124, 2
    %v126 = vadd.f32 %v124, %v125
    %v127 = vrot.slane %v126, 1
    %v128 = vadd.f32 %v126, %v127
    %v129 = vsel %vm119, %v113, 0.0
    %v130 = vsel %vm119, %v114, 0.0
    %v131 = vadd.f32 %v129, %v130
    %v132 = vrot.slane %v131, 4
    %v133 = vadd.f32 %v131, %v132
    %v134 = vrot.slane %v133, 2
    %v135 = vadd.f32 %v133, %v134
    %v136 = vrot.slane %v135, 1
    %v137 = vadd.f32 %v135, %v136
    %v138 = vmax.f32 %v137, 1.0
    %v139 = vrcp.pop %v138
    %v140 = vmul.f32 %v138, %v139
    %v141 = vsub.f32 1.0, %v140
    %v142 = vmul.f32 %v139, %v141
    %v143 = vadd.f32 %v139, %v142
    %vm144 = vweird.f32 %v138
    %vm145 = vweird.f32 %v139
    %vm146 = vmor %vm144, %vm145
    %v147 = vsel %vm146, %v139, %v143
    %v148 = vand.u32 2147483647, %v138
    %vm149 = vcmp.eq.f32.partialorder %v148, 8.507059e+37
    %v150 = vand.u32 %v138, 2147483648
    %v151 = vor.u32 1.1754944e-38, %v150
    %v152 = vsel %vm149, %v151, %v147
    %v153 = vmul.f32 %v128, %v152
    %vm154 = vcmask 0
    %155 = vst.msk [vmem:[#allocation2] sm:$0x1] %vm154, %v153
    // Predicated region
    $region18: #{bert_forward.7} parent=1 // pred_check
      _
    $region19: #{bert_forward.7} parent=1 // pred_check_branch
      %157 = sbr.rel (0) target = $region21
    $region20: #{bert_forward.7} parent=1 // pred_region
      _
    $region21: #{bert_forward.7} parent=1 // pred_fallthru
      _
    // Predicated region
    $region22: #{bert_forward.7} parent=1 // pred_check
      _
    $region23: #{bert_forward.7} parent=1 // pred_check_branch
      %159 = sbr.rel (0) target = $region25
    $region24: #{bert_forward.7} parent=1 // pred_region
      %161 = vsyncadd [#allocation3], 0
      %s163 = sshll.u32 [#allocation2], 4
      %s164 = int_to_ptr.vmem [resolvable:$true] %s163
      %s165 = sshll.u32 %s5, 4
      %s166 = int_to_ptr.hbm [resolvable:$true] %s165
      %168 = dma.vmem_to_hbm [thread:$0]  %s164, 16, %s166, [#allocation3]
    $region25: #{bert_forward.7} parent=1 // pred_fallthru
      _
    // Predicated region
    $region26: #{bert_forward.7} parent=1 // pred_check
      _
    $region27: #{bert_forward.7} parent=1 // pred_check_branch
      %170 = sbr.rel (0) target = $region29
    $region28: #{bert_forward.7} parent=1 // pred_region
      _
    $region29: #{bert_forward.7} parent=1 // pred_fallthru
      _
    // Predicated region
    $region30: #{bert_forward.7} parent=1 // pred_check
      _
    $region31: #{bert_forward.7} parent=1 // pred_check_branch
      %172 = sbr.rel (0) target = $region33
    $region32: #{bert_forward.7} parent=1 // pred_region
      %174 = dma.done [#allocation3], 16
    $region33: #{bert_forward.7} parent=1 // pred_fallthru
      _
    %175 = vsyncpa [#allocation3], 1

// kernel: bert_forward.5
$region0: #{bert_forward.5}
  #allocation0 [shape = 'u32[]', space=smem, size = 0x4, offset = 0x4, fixed_abs, tag = 'smem constant byte address 0x4 - core index']
  #allocation1 [shape = 'u32[72,128]{1,0:T(1,128)}', space=vmem, size = 0x9000, scoped, tag = 'internal scratch']
  %s0 = inlined_call_operand.vmem [shape: f32[16,32], index: 0, kind: input, shape index: {}]
  %s1 = inlined_call_operand.vmem [shape: f32[2,1,8], index: 1, kind: input, shape index: {}]
  %s2 = inlined_call_operand.vmem [shape: bf16[6,32,16], index: 2, kind: input, shape index: {}]
  %s3 = inlined_call_operand.vmem [shape: f32[6,1,16], index: 3, kind: input, shape index: {}]
  %s4 = inlined_call_operand.vmem [shape: bf16[2,16,32], index: 4, kind: input, shape index: {}]
  %s5 = inlined_call_operand.vmem [shape: f32[1,32], index: 5, kind: input, shape index: {}]
  %s6 = inlined_call_operand.vmem [shape: f32[1,32], index: 6, kind: input, shape index: {}]
  %s7 = inlined_call_operand.vmem [shape: f32[1,32], index: 7, kind: input, shape index: {}]
  %s8 = inlined_call_operand.vmem [shape: bf16[32,128], index: 8, kind: input, shape index: {}]
  %s9 = inlined_call_operand.vmem [shape: f32[1,128], index: 9, kind: input, shape index: {}]
  %s10 = inlined_call_operand.vmem [shape: bf16[128,32], index: 10, kind: input, shape index: {}]
  %s11 = inlined_call_operand.vmem [shape: f32[1,32], index: 11, kind: input, shape index: {}]
  %s12 = inlined_call_operand.vmem [shape: f32[1,32], index: 12, kind: input, shape index: {}]
  %s13 = inlined_call_operand.vmem [shape: f32[1,32], index: 13, kind: input, shape index: {}]
  %s14 = inlined_call_operand.vmem [shape: f32[16,32], index: 14, kind: output, shape index: {}]
  %s15 = sld [smem:[#allocation0]]
  $region89: #{bert_forward.5} parent=0
    _
  %s17 = ssub.s32 1, %s15
  %s18 = scalar_select 0, %s17, %s15
  loop: start=0, step=1, limit=4
  $region2: #{bert_forward.5} parent=0 // loop_pre_header
    _
  $region3: #{bert_forward.5} parent=0 // loop_header
    %s20 = sphi 0, %s24
    %p21 = scmp.ge.s32.totalorder %s20, 4
    %s30 = sphi 0, %s32
    %s33 = sphi 0, %s30
    %s34 = sphi 0, %s33
    %s50 = sphi 0, %s34
    %s56 = sphi 0, %s58
    %s59 = sphi 0, %s56
    %s60 = sphi 0, %s59
    %s76 = sphi 0, %s60
    %s80 = sphi 0, %s80
    %s82 = sphi 0, %s80
    %s83 = sphi 0, %s82
    %s97 = sphi 0, %s83
    %s101 = sphi 0, %s101
    %s103 = sphi 0, %s101
    %s104 = sphi 0, %s103
    %s118 = sphi 0, %s104
    %s122 = sphi 0, %s122
    %s124 = sphi 0, %s122
    %s125 = sphi 0, %s124
    %s139 = sphi 0, %s125
    %s143 = sphi 0, %s143
    %s145 = sphi 0, %s143
    %s146 = sphi 0, %s145
    %s160 = sphi 0, %s146
    %s164 = sphi 0, %s164
    %s166 = sphi 0, %s164
    %s167 = sphi 0, %s166
    %s181 = sphi 0, %s167
    %s185 = sphi 0, %s185
    %s187 = sphi 0, %s185
    %s188 = sphi 0, %s187
    %s202 = sphi 0, %s188
    %s206 = sphi 0, %s206
    %s208 = sphi 0, %s206
    %s209 = sphi 0, %s208
    %s223 = sphi 0, %s209
    %s227 = sphi 0, %s227
    %s229 = sphi 0, %s227
    %s230 = sphi 0, %s229
    %s244 = sphi 0, %s230
    %s248 = sphi 0, %s248
    %s250 = sphi 0, %s248
    %s251 = sphi 0, %s250
    %s265 = sphi 0, %s251
    %s269 = sphi 0, %s269
    %s271 = sphi 0, %s269
    %s272 = sphi 0, %s271
    %s286 = sphi 0, %s272
    %s290 = sphi 0, %s290
    %s292 = sphi 0, %s290
    %s293 = sphi 0, %s292
    %s307 = sphi 0, %s293
    %s311 = sphi 0, %s311
    %s313 = sphi 0, %s311
    %s314 = sphi 0, %s313
    %s328 = sphi 0, %s314
    %s334 = sphi 0, %s336
    %s337 = sphi 0, %s334
    %s338 = sphi 0, %s337
    %s354 = sphi 0, %s338
  $region4: #{bert_forward.5} parent=0 // loop_header_branch
    %23 = sbr.rel (%p21) target = $region8
  $region5: #{bert_forward.5} parent=0 // loop_body
    %s25 = ssub.s32 %s20, 1
    %s26 = ssub.s32 %s20, 2
    %s27 = sadd.s32 %s20, 1
    %s28 = ssub.s32 %s20, %s27
    %p29 = scmp.eq.s32.totalorder %s28, 0
    %s31 = sadd.s32 %s30, 1
    %s32 = scalar_select %p29, %s30, %s31
    %p35 = pneg %p29
    %p36 = scmp.eq.s32.totalorder %s20, 1
    %p37 = por %p35, %p36
    %p38 = scmp.ne.s32.totalorder %s30, %s33
    %p39 = scmp.eq.s32.totalorder %s20, 0
    %p40 = por %p38, %p39
    %p41 = scmp.ne.s32.totalorder %s30, %s33
    %p42 = scmp.eq.s32.totalorder %s25, 1
    %p43 = por %p41, %p42
    %p44 = scmp.ne.s32.totalorder %s33, %s34
    %p45 = scmp.eq.s32.totalorder %s25, 0
    %p46 = por %p44, %p45
    %p47 = scmp.ne.s32.totalorder %s33, %s34
    %p48 = scmp.eq.s32.totalorder %s26, 1
    %p49 = por %p47, %p48
    %p51 = scmp.ne.s32.totalorder %s34, %s50
    %p52 = scmp.eq.s32.totalorder %s26, 0
    %p53 = por %p51, %p52
    %s54 = ssub.s32 %s20, %s27
    %p55 = scmp.eq.s32.totalorder %s54, 0
    %s57 = sadd.s32 %s56, 1
    %s58 = scalar_select %p55, %s56, %s57
    %p61 = pneg %p55
    %p62 = scmp.eq.s32.totalorder %s20, 1
    %p63 = por %p61, %p62
    %p64 = scmp.ne.s32.totalorder %s56, %s59
    %p65 = scmp.eq.s32.totalorder %s20, 0
    %p66 = por %p64, %p65
    %p67 = scmp.ne.s32.totalorder %s56, %s59
    %p68 = scmp.eq.s32.totalorder %s25, 1
    %p69 = por %p67, %p68
    %p70 = scmp.ne.s32.totalorder %s59, %s60
    %p71 = scmp.eq.s32.totalorder %s25, 0
    %p72 = por %p70, %p71
    %p73 = scmp.ne.s32.totalorder %s59, %s60
    %p74 = scmp.eq.s32.totalorder %s26, 1
    %p75 = por %p73, %p74
    %p77 = scmp.ne.s32.totalorder %s60, %s76
    %p78 = scmp.eq.s32.totalorder %s26, 0
    %p79 = por %p77, %p78
    %s81 = sadd.s32 %s80, 1
    %p84 = scmp.eq.s32.totalorder %s20, 1
    %p85 = scmp.ne.s32.totalorder %s80, %s82
    %p86 = scmp.eq.s32.totalorder %s20, 0
    %p87 = por %p85, %p86
    %p88 = scmp.ne.s32.totalorder %s80, %s82
    %p89 = scmp.eq.s32.totalorder %s25, 1
    %p90 = por %p88, %p89
    %p91 = scmp.ne.s32.totalorder %s82, %s83
    %p92 = scmp.eq.s32.totalorder %s25, 0
    %p93 = por %p91, %p92
    %p94 = scmp.ne.s32.totalorder %s82, %s83
    %p95 = scmp.eq.s32.totalorder %s26, 1
    %p96 = por %p94, %p95
    %p98 = scmp.ne.s32.totalorder %s83, %s97
    %p99 = scmp.eq.s32.totalorder %s26, 0
    %p100 = por %p98, %p99
    %s102 = sadd.s32 %s101, 1
    %p105 = scmp.eq.s32.totalorder %s20, 1
    %p106 = scmp.ne.s32.totalorder %s101, %s103
    %p107 = scmp.eq.s32.totalorder %s20, 0
    %p108 = por %p106, %p107
    %p109 = scmp.ne.s32.totalorder %s101, %s103
    %p110 = scmp.eq.s32.totalorder %s25, 1
    %p111 = por %p109, %p110
    %p112 = scmp.ne.s32.totalorder %s103, %s104
    %p113 = scmp.eq.s32.totalorder %s25, 0
    %p114 = por %p112, %p113
    %p115 = scmp.ne.s32.totalorder %s103, %s104
    %p116 = scmp.eq.s32.totalorder %s26, 1
    %p117 = por %p115, %p116
    %p119 = scmp.ne.s32.totalorder %s104, %s118
    %p120 = scmp.eq.s32.totalorder %s26, 0
    %p121 = por %p119, %p120
    %s123 = sadd.s32 %s122, 1
    %p126 = scmp.eq.s32.totalorder %s20, 1
    %p127 = scmp.ne.s32.totalorder %s122, %s124
    %p128 = scmp.eq.s32.totalorder %s20, 0
    %p129 = por %p127, %p128
    %p130 = scmp.ne.s32.totalorder %s122, %s124
    %p131 = scmp.eq.s32.totalorder %s25, 1
    %p132 = por %p130, %p131
    %p133 = scmp.ne.s32.totalorder %s124, %s125
    %p134 = scmp.eq.s32.totalorder %s25, 0
    %p135 = por %p133, %p134
    %p136 = scmp.ne.s32.totalorder %s124, %s125
    %p137 = scmp.eq.s32.totalorder %s26, 1
    %p138 = por %p136, %p137
    %p140 = scmp.ne.s32.totalorder %s125, %s139
    %p141 = scmp.eq.s32.totalorder %s26, 0
    %p142 = por %p140, %p141
    %s144 = sadd.s32 %s143, 1
    %p147 = scmp.eq.s32.totalorder %s20, 1
    %p148 = scmp.ne.s32.totalorder %s143, %s145
    %p149 = scmp.eq.s32.totalorder %s20, 0
    %p150 = por %p148, %p149
    %p151 = scmp.ne.s32.totalorder %s143, %s145
    %p152 = scmp.eq.s32.totalorder %s25, 1
    %p153 = por %p151, %p152
    %p154 = scmp.ne.s32.totalorder %s145, %s146
    %p155 = scmp.eq.s32.totalorder %s25, 0
    %p156 = por %p154, %p155
    %p157 = scmp.ne.s32.totalorder %s145, %s146
    %p158 = scmp.eq.s32.totalorder %s26, 1
    %p159 = por %p157, %p158
    %p161 = scmp.ne.s32.totalorder %s146, %s160
    %p162 = scmp.eq.s32.totalorder %s26, 0
    %p163 = por %p161, %p162
    %s165 = sadd.s32 %s164, 1
    %p168 = scmp.eq.s32.totalorder %s20, 1
    %p169 = scmp.ne.s32.totalorder %s164, %s166
    %p170 = scmp.eq.s32.totalorder %s20, 0
    %p171 = por %p169, %p170
    %p172 = scmp.ne.s32.totalorder %s164, %s166
    %p173 = scmp.eq.s32.totalorder %s25, 1
    %p174 = por %p172, %p173
    %p175 = scmp.ne.s32.totalorder %s166, %s167
    %p176 = scmp.eq.s32.totalorder %s25, 0
    %p177 = por %p175, %p176
    %p178 = scmp.ne.s32.totalorder %s166, %s167
    %p179 = scmp.eq.s32.totalorder %s26, 1
    %p180 = por %p178, %p179
    %p182 = scmp.ne.s32.totalorder %s167, %s181
    %p183 = scmp.eq.s32.totalorder %s26, 0
    %p184 = por %p182, %p183
    %s186 = sadd.s32 %s185, 1
    %p189 = scmp.eq.s32.totalorder %s20, 1
    %p190 = scmp.ne.s32.totalorder %s185, %s187
    %p191 = scmp.eq.s32.totalorder %s20, 0
    %p192 = por %p190, %p191
    %p193 = scmp.ne.s32.totalorder %s185, %s187
    %p194 = scmp.eq.s32.totalorder %s25, 1
    %p195 = por %p193, %p194
    %p196 = scmp.ne.s32.totalorder %s187, %s188
    %p197 = scmp.eq.s32.totalorder %s25, 0
    %p198 = por %p196, %p197
    %p199 = scmp.ne.s32.totalorder %s187, %s188
    %p200 = scmp.eq.s32.totalorder %s26, 1
    %p201 = por %p199, %p200
    %p203 = scmp.ne.s32.totalorder %s188, %s202
    %p204 = scmp.eq.s32.totalorder %s26, 0
    %p205 = por %p203, %p204
    %s207 = sadd.s32 %s206, 1
    %p210 = scmp.eq.s32.totalorder %s20, 1
    %p211 = scmp.ne.s32.totalorder %s206, %s208
    %p212 = scmp.eq.s32.totalorder %s20, 0
    %p213 = por %p211, %p212
    %p214 = scmp.ne.s32.totalorder %s206, %s208
    %p215 = scmp.eq.s32.totalorder %s25, 1
    %p216 = por %p214, %p215
    %p217 = scmp.ne.s32.totalorder %s208, %s209
    %p218 = scmp.eq.s32.totalorder %s25, 0
    %p219 = por %p217, %p218
    %p220 = scmp.ne.s32.totalorder %s208, %s209
    %p221 = scmp.eq.s32.totalorder %s26, 1
    %p222 = por %p220, %p221
    %p224 = scmp.ne.s32.totalorder %s209, %s223
    %p225 = scmp.eq.s32.totalorder %s26, 0
    %p226 = por %p224, %p225
    %s228 = sadd.s32 %s227, 1
    %p231 = scmp.eq.s32.totalorder %s20, 1
    %p232 = scmp.ne.s32.totalorder %s227, %s229
    %p233 = scmp.eq.s32.totalorder %s20, 0
    %p234 = por %p232, %p233
    %p235 = scmp.ne.s32.totalorder %s227, %s229
    %p236 = scmp.eq.s32.totalorder %s25, 1
    %p237 = por %p235, %p236
    %p238 = scmp.ne.s32.totalorder %s229, %s230
    %p239 = scmp.eq.s32.totalorder %s25, 0
    %p240 = por %p238, %p239
    %p241 = scmp.ne.s32.totalorder %s229, %s230
    %p242 = scmp.eq.s32.totalorder %s26, 1
    %p243 = por %p241, %p242
    %p245 = scmp.ne.s32.totalorder %s230, %s244
    %p246 = scmp.eq.s32.totalorder %s26, 0
    %p247 = por %p245, %p246
    %s249 = sadd.s32 %s248, 1
    %p252 = scmp.eq.s32.totalorder %s20, 1
    %p253 = scmp.ne.s32.totalorder %s248, %s250
    %p254 = scmp.eq.s32.totalorder %s20, 0
    %p255 = por %p253, %p254
    %p256 = scmp.ne.s32.totalorder %s248, %s250
    %p257 = scmp.eq.s32.totalorder %s25, 1
    %p258 = por %p256, %p257
    %p259 = scmp.ne.s32.totalorder %s250, %s251
    %p260 = scmp.eq.s32.totalorder %s25, 0
    %p261 = por %p259, %p260
    %p262 = scmp.ne.s32.totalorder %s250, %s251
    %p263 = scmp.eq.s32.totalorder %s26, 1
    %p264 = por %p262, %p263
    %p266 = scmp.ne.s32.totalorder %s251, %s265
    %p267 = scmp.eq.s32.totalorder %s26, 0
    %p268 = por %p266, %p267
    %s270 = sadd.s32 %s269, 1
    %p273 = scmp.eq.s32.totalorder %s20, 1
    %p274 = scmp.ne.s32.totalorder %s269, %s271
    %p275 = scmp.eq.s32.totalorder %s20, 0
    %p276 = por %p274, %p275
    %p277 = scmp.ne.s32.totalorder %s269, %s271
    %p278 = scmp.eq.s32.totalorder %s25, 1
    %p279 = por %p277, %p278
    %p280 = scmp.ne.s32.totalorder %s271, %s272
    %p281 = scmp.eq.s32.totalorder %s25, 0
    %p282 = por %p280, %p281
    %p283 = scmp.ne.s32.totalorder %s271, %s272
    %p284 = scmp.eq.s32.totalorder %s26, 1
    %p285 = por %p283, %p284
    %p287 = scmp.ne.s32.totalorder %s272, %s286
    %p288 = scmp.eq.s32.totalorder %s26, 0
    %p289 = por %p287, %p288
    %s291 = sadd.s32 %s290, 1
    %p294 = scmp.eq.s32.totalorder %s20, 1
    %p295 = scmp.ne.s32.totalorder %s290, %s292
    %p296 = scmp.eq.s32.totalorder %s20, 0
    %p297 = por %p295, %p296
    %p298 = scmp.ne.s32.totalorder %s290, %s292
    %p299 = scmp.eq.s32.totalorder %s25, 1
    %p300 = por %p298, %p299
    %p301 = scmp.ne.s32.totalorder %s292, %s293
    %p302 = scmp.eq.s32.totalorder %s25, 0
    %p303 = por %p301, %p302
    %p304 = scmp.ne.s32.totalorder %s292, %s293
    %p305 = scmp.eq.s32.totalorder %s26, 1
    %p306 = por %p304, %p305
    %p308 = scmp.ne.s32.totalorder %s293, %s307
    %p309 = scmp.eq.s32.totalorder %s26, 0
    %p310 = por %p308, %p309
    %s312 = sadd.s32 %s311, 1
    %p315 = scmp.eq.s32.totalorder %s20, 1
    %p316 = scmp.ne.s32.totalorder %s311, %s313
    %p317 = scmp.eq.s32.totalorder %s20, 0
    %p318 = por %p316, %p317
    %p319 = scmp.ne.s32.totalorder %s311, %s313
    %p320 = scmp.eq.s32.totalorder %s25, 1
    %p321 = por %p319, %p320
    %p322 = scmp.ne.s32.totalorder %s313, %s314
    %p323 = scmp.eq.s32.totalorder %s25, 0
    %p324 = por %p322, %p323
    %p325 = scmp.ne.s32.totalorder %s313, %s314
    %p326 = scmp.eq.s32.totalorder %s26, 1
    %p327 = por %p325, %p326
    %p329 = scmp.ne.s32.totalorder %s314, %s328
    %p330 = scmp.eq.s32.totalorder %s26, 0
    %p331 = por %p329, %p330
    %s332 = ssub.s32 %s20, %s27
    %p333 = scmp.eq.s32.totalorder %s332, 0
    %s335 = sadd.s32 %s334, 1
    %s336 = scalar_select %p333, %s334, %s335
    %p339 = pneg %p333
    %p340 = scmp.eq.s32.totalorder %s20, 1
    %p341 = por %p339, %p340
    %p342 = scmp.ne.s32.totalorder %s334, %s337
    %p343 = scmp.eq.s32.totalorder %s20, 0
    %p344 = por %p342, %p343
    %p345 = scmp.ne.s32.totalorder %s334, %s337
    %p346 = scmp.eq.s32.totalorder %s25, 1
    %p347 = por %p345, %p346
    %p348 = scmp.ne.s32.totalorder %s337, %s338
    %p349 = scmp.eq.s32.totalorder %s25, 0
    %p350 = por %p348, %p349
    %p351 = scmp.ne.s32.totalorder %s337, %s338
    %p352 = scmp.eq.s32.totalorder %s26, 1
    %p353 = por %p351, %p352
    %p355 = scmp.ne.s32.totalorder %s338, %s354
    %p356 = scmp.eq.s32.totalorder %s26, 0
    %p357 = por %p355, %p356
    %p358 = scmp.le.s32.totalorder 1, %s20
    %p359 = scmp.lt.s32.totalorder %s20, 3
    %p360 = pnand %p358, %p359
    %p361 = pneg %p360
    // Predicated region
    $region9: #{bert_forward.5} parent=5 // pred_check
      _
    $region10: #{bert_forward.5} parent=5 // pred_check_branch
      %363 = sbr.rel (%p360) target = $region12
    $region11: #{bert_forward.5} parent=5 // pred_region
      %s364 = ssub.s32 %s20, 1
      // Predicated region
      $region13: #{bert_forward.5} parent=11 // pred_check
        %p365 = pneg %p93
      $region14: #{bert_forward.5} parent=11 // pred_check_branch
        %367 = sbr.rel (%p365) target = $region16
      $region15: #{bert_forward.5} parent=11 // pred_region
        _
      $region16: #{bert_forward.5} parent=11 // pred_fallthru
        _
      // Predicated region
      $region17: #{bert_forward.5} parent=11 // pred_check
        %p368 = pneg %p114
      $region18: #{bert_forward.5} parent=11 // pred_check_branch
        %370 = sbr.rel (%p368) target = $region20
      $region19: #{bert_forward.5} parent=11 // pred_region
        _
      $region20: #{bert_forward.5} parent=11 // pred_fallthru
        _
      // Predicated region
      $region21: #{bert_forward.5} parent=11 // pred_check
        %p371 = pneg %p135
      $region22: #{bert_forward.5} parent=11 // pred_check_branch
        %373 = sbr.rel (%p371) target = $region24
      $region23: #{bert_forward.5} parent=11 // pred_region
        _
      $region24: #{bert_forward.5} parent=11 // pred_fallthru
        _
      // Predicated region
      $region25: #{bert_forward.5} parent=11 // pred_check
        %p374 = pneg %p156
      $region26: #{bert_forward.5} parent=11 // pred_check_branch
        %376 = sbr.rel (%p374) target = $region28
      $region27: #{bert_forward.5} parent=11 // pred_region
        _
      $region28: #{bert_forward.5} parent=11 // pred_fallthru
        _
      // Predicated region
      $region29: #{bert_forward.5} parent=11 // pred_check
        %p377 = pneg %p177
      $region30: #{bert_forward.5} parent=11 // pred_check_branch
        %379 = sbr.rel (%p377) target = $region32
      $region31: #{bert_forward.5} parent=11 // pred_region
        _
      $region32: #{bert_forward.5} parent=11 // pred_fallthru
        _
      // Predicated region
      $region33: #{bert_forward.5} parent=11 // pred_check
        %p380 = pneg %p198
      $region34: #{bert_forward.5} parent=11 // pred_check_branch
        %382 = sbr.rel (%p380) target = $region36
      $region35: #{bert_forward.5} parent=11 // pred_region
        _
      $region36: #{bert_forward.5} parent=11 // pred_fallthru
        _
      // Predicated region
      $region37: #{bert_forward.5} parent=11 // pred_check
        %p383 = pneg %p219
      $region38: #{bert_forward.5} parent=11 // pred_check_branch
        %385 = sbr.rel (%p383) target = $region40
      $region39: #{bert_forward.5} parent=11 // pred_region
        _
      $region40: #{bert_forward.5} parent=11 // pred_fallthru
        _
      // Predicated region
      $region41: #{bert_forward.5} parent=11 // pred_check
        %p386 = pneg %p240
      $region42: #{bert_forward.5} parent=11 // pred_check_branch
        %388 = sbr.rel (%p386) target = $region44
      $region43: #{bert_forward.5} parent=11 // pred_region
        _
      $region44: #{bert_forward.5} parent=11 // pred_fallthru
        _
      // Predicated region
      $region45: #{bert_forward.5} parent=11 // pred_check
        %p389 = pneg %p261
      $region46: #{bert_forward.5} parent=11 // pred_check_branch
        %391 = sbr.rel (%p389) target = $region48
      $region47: #{bert_forward.5} parent=11 // pred_region
        _
      $region48: #{bert_forward.5} parent=11 // pred_fallthru
        _
      // Predicated region
      $region49: #{bert_forward.5} parent=11 // pred_check
        %p392 = pneg %p282
      $region50: #{bert_forward.5} parent=11 // pred_check_branch
        %394 = sbr.rel (%p392) target = $region52
      $region51: #{bert_forward.5} parent=11 // pred_region
        _
      $region52: #{bert_forward.5} parent=11 // pred_fallthru
        _
      // Predicated region
      $region53: #{bert_forward.5} parent=11 // pred_check
        %p395 = pneg %p303
      $region54: #{bert_forward.5} parent=11 // pred_check_branch
        %397 = sbr.rel (%p395) target = $region56
      $region55: #{bert_forward.5} parent=11 // pred_region
        _
      $region56: #{bert_forward.5} parent=11 // pred_fallthru
        _
      // Predicated region
      $region57: #{bert_forward.5} parent=11 // pred_check
        %p398 = pneg %p324
      $region58: #{bert_forward.5} parent=11 // pred_check_branch
        %400 = sbr.rel (%p398) target = $region60
      $region59: #{bert_forward.5} parent=11 // pred_region
        _
      $region60: #{bert_forward.5} parent=11 // pred_fallthru
        _
    $region12: #{bert_forward.5} parent=5 // pred_fallthru
      _
    %p401 = scmp.lt.s32.totalorder %s20, 2
    // Predicated region
    $region61: #{bert_forward.5} parent=5 // pred_check
      %p402 = pneg %p401
    $region62: #{bert_forward.5} parent=5 // pred_check_branch
      %404 = sbr.rel (%p402) target = $region64
    $region63: #{bert_forward.5} parent=5 // pred_region
      // Predicated region
      $region65: #{bert_forward.5} parent=63 // pred_check
        %p405 = pneg %p40
      $region66: #{bert_forward.5} parent=63 // pred_check_branch
        %407 = sbr.rel (%p405) target = $region68
      $region67: #{bert_forward.5} parent=63 // pred_region
        %p408 = scmp.lt.s32.totalorder %s20, 1
        %s409 = scalar_select %p408, %s20, 1
        %s410 = smul.addr %s409, 8
        %s411 = scalar_lea.vmem %s0, %s410
      $region68: #{bert_forward.5} parent=63 // pred_fallthru
        _
      // Predicated region
      $region69: #{bert_forward.5} parent=63 // pred_check
        %p412 = pneg %p66
      $region70: #{bert_forward.5} parent=63 // pred_check_branch
        %414 = sbr.rel (%p412) target = $region72
      $region71: #{bert_forward.5} parent=63 // pred_region
        %p415 = scmp.lt.s32.totalorder %s20, 1
        %s416 = scalar_select %p415, %s20, 1
        %s417 = scalar_lea.vmem %s1, %s416
      $region72: #{bert_forward.5} parent=63 // pred_fallthru
        _
    $region64: #{bert_forward.5} parent=5 // pred_fallthru
      _
    %p418 = scmp.le.s32.totalorder 1, %s20
    %p419 = scmp.lt.s32.totalorder %s20, 3
    %p420 = pnand %p418, %p419
    %p421 = pneg %p420
    // Predicated region
    $region73: #{bert_forward.5} parent=5 // pred_check
      _
    $region74: #{bert_forward.5} parent=5 // pred_check_branch
      %423 = sbr.rel (%p420) target = $region76
    $region75: #{bert_forward.5} parent=5 // pred_region
      %s424 = ssub.s32 %s20, 1
      %p425 = scmp.lt.s32.totalorder %s25, 1
      %s426 = scalar_select %p425, %s25, 1
      %s427 = smul.addr %s426, 8
      %s428 = scalar_lea.vmem %s0, %s427
      %p429 = pneg %p46
      %p430 = pneg %p43
      %p431 = scmp.lt.s32.totalorder %s25, 1
      %s432 = scalar_select %p431, %s25, 1
      %s433 = scalar_lea.vmem %s1, %s432
      %p434 = pneg %p72
      %p435 = pneg %p69
      %p436 = pneg %p93
      %p437 = pneg %p90
      %p438 = pneg %p114
      %p439 = pneg %p111
      %p440 = pneg %p135
      %p441 = pneg %p132
      %p442 = pneg %p156
      %p443 = pneg %p153
      %p444 = pneg %p177
      %p445 = pneg %p174
      %p446 = pneg %p198
      %p447 = pneg %p195
      %p448 = pneg %p219
      %p449 = pneg %p216
      %p450 = pneg %p240
      %p451 = pneg %p237
      %p452 = pneg %p261
      %p453 = pneg %p258
      %p454 = pneg %p282
      %p455 = pneg %p279
      %p456 = pneg %p303
      %p457 = pneg %p300
      %p458 = pneg %p324
      %p459 = pneg %p321
      %p460 = pneg %p350
      %p461 = pneg %p347
      %p462 = scmp.lt.s32.totalorder %s25, 1
      %s463 = scalar_select %p462, %s25, 1
      %s464 = smul.addr %s463, 8
      %s465 = scalar_lea.vmem %s14, %s464
      %p466 = scmp.lt.s32.totalorder %s25, 1
      %s467 = scalar_select %p466, %s25, 1
      %s468 = smul.addr %s467, 8
      %s469 = scalar_lea.vmem %s0, %s468
      %p470 = scmp.lt.s32.totalorder %s25, 1
      %s471 = scalar_select %p470, %s25, 1
      %s472 = scalar_lea.vmem %s1, %s471
      %p473 = scmp.lt.s32.totalorder %s25, 1
      %s474 = scalar_select %p473, %s25, 1
      %s475 = smul.addr %s474, 8
      %s476 = scalar_lea.vmem %s14, %s475
      %v478 = vld [vmem:[%s469] sm:$0xff]
      %v479 = vpack.c.bf16 %v478, %v478
      %v480 = vld [vmem:[%s472] sm:$0x1]
      %v481 = vld [vmem:[%s2] sm:$0xf]
      %v482 = vld [vmem:[%s2 + $0x4] sm:$0xf]
      %v483 = vld [vmem:[%s2 + $0x8] sm:$0xf]
      %v484 = vld [vmem:[%s2 + $0xc] sm:$0xf]
      %v485 = vld [vmem:[%s3] sm:$0x1]
      %v487 = vperm.slane %v485, 0
      %v493 = vunpack.c.l.b16 %v481
      %v494 = vunpack.c.l.b16 %v482
      %v495 = vunpack.c.l.b16 %v483
      %v496 = vunpack.c.l.b16 %v484
      %v497 = vpack.c.b16 %v494, %v493
      %v498 = vpack.c.b16 %v496, %v495
      %vm501 = vcmask 261120
      %v503 = vsel %vm501, %v479, 0
      %505 = vmatpush.bf16.msra.mxu0 0
      %506 = vmatpush.bf16.msra.mxu0 0
      %507 = vmatpush.bf16.msra.mxu0 0
      %508 = vmatpush.bf16.msra.mxu0 0
      %509 = vmatpush.bf16.msra.mxu0 0
      %510 = vmatpush.bf16.msra.mxu0 0
      %511 = vmatpush.bf16.msra.mxu0 %v498
      %512 = vmatpush.bf16.msra.mxu0 %v497
      %513 = vmatmul.bf16.gmra.mxu0 %v503
      %v514 = vpop.f32.mrf.mxu0
      %v515 = vadd.f32 %v487, %v514
      %v516 = vpop.f32.mrf.mxu0
      %517 = vdwg.mxu0
      %s518 = scalar_lea.vmem %s2, 32
      %v519 = vld [vmem:[%s518] sm:$0xf]
      %v520 = vld [vmem:[%s518 + $0x4] sm:$0xf]
      %v521 = vld [vmem:[%s518 + $0x8] sm:$0xf]
      %v522 = vld [vmem:[%s518 + $0xc] sm:$0xf]
      %s523 = scalar_lea.vmem %s3, 2
      %v524 = vld [vmem:[%s523] sm:$0x1]
      %v526 = vperm.slane %v524, 0
      %v532 = vunpack.c.l.b16 %v519
      %v533 = vunpack.c.l.b16 %v520
      %v534 = vunpack.c.l.b16 %v521
      %v535 = vunpack.c.l.b16 %v522
      %v536 = vpack.c.b16 %v533, %v532
      %v537 = vpack.c.b16 %v535, %v534
      %540 = vmatpush.bf16.msra.mxu0 0
      %541 = vmatpush.bf16.msra.mxu0 0
      %542 = vmatpush.bf16.msra.mxu0 0
      %543 = vmatpush.bf16.msra.mxu0 0
      %544 = vmatpush.bf16.msra.mxu0 0
      %545 = vmatpush.bf16.msra.mxu0 0
      %546 = vmatpush.bf16.msra.mxu0 %v537
      %547 = vmatpush.bf16.msra.mxu0 %v536
      %548 = vmatmul.bf16.gmra.mxu0 %v503
      %v549 = vpop.f32.mrf.mxu0
      %v550 = vadd.f32 %v526, %v549
      %v551 = vpop.f32.mrf.mxu0
      %552 = vdwg.mxu0
      %s553 = scalar_lea.vmem %s2, 64
      %v554 = vld [vmem:[%s553] sm:$0xf]
      %v555 = vld [vmem:[%s553 + $0x4] sm:$0xf]
      %v556 = vld [vmem:[%s553 + $0x8] sm:$0xf]
      %v557 = vld [vmem:[%s553 + $0xc] sm:$0xf]
      %s558 = scalar_lea.vmem %s3, 4
      %v559 = vld [vmem:[%s558] sm:$0x1]
      %v561 = vperm.slane %v559, 0
      %v567 = vunpack.c.l.b16 %v554
      %v568 = vunpack.c.l.b16 %v555
      %v569 = vunpack.c.l.b16 %v556
      %v570 = vunpack.c.l.b16 %v557
      %v571 = vpack.c.b16 %v568, %v567
      %v572 = vpack.c.b16 %v570, %v569
      %575 = vmatpush.bf16.msra.mxu0 0
      %576 = vmatpush.bf16.msra.mxu0 0
      %577 = vmatpush.bf16.msra.mxu0 0
      %578 = vmatpush.bf16.msra.mxu0 0
      %579 = vmatpush.bf16.msra.mxu0 0
      %580 = vmatpush.bf16.msra.mxu0 0
      %581 = vmatpush.bf16.msra.mxu0 %v572
      %582 = vmatpush.bf16.msra.mxu0 %v571
      %583 = vmatmul.bf16.gmra.mxu0 %v503
      %v584 = vpop.f32.mrf.mxu0
      %v585 = vadd.f32 %v561, %v584
      %v586 = vpop.f32.mrf.mxu0
      %587 = vdwg.mxu0
      %v588 = vpack.c.bf16 %v515, %v515
      %v589 = vpack.c.bf16 %v550, %v550
      %vm590 = vcmask 130048
      %v592 = vsel %vm590, %v588, 0
      %v595 = vsel %vm590, %v589, 0
      %597 = vmatpush.bf16.xpose.msra.mxu0 0
      %598 = vmatpush.bf16.xpose.msra.mxu0 0
      %599 = vmatpush.bf16.xpose.msra.mxu0 0
      %600 = vmatpush.bf16.xpose.msra.mxu0 0
      %601 = vmatpush.bf16.xpose.msra.mxu0 0
      %602 = vmatpush.bf16.xpose.msra.mxu0 0
      %603 = vmatpush.bf16.xpose.msra.mxu0 0
      %604 = vmatpush.bf16.xpose.msra.mxu0 %v595
      %605 = vmatmul.bf16.gmra.mxu0 %v592
      %v606 = vpop.f32.mrf.mxu0
      %v607 = vadd.f32 0.0, %v606
      %v608 = vpop.f32.mrf.mxu0
      %609 = vdwg.mxu0
      %v610 = vmul.f32 %v607, 0.25
      %v612 = vperm.slane %v480, 0
      %v614 = vadd.f32 %v610, %v612
      %vm615 = vcmask 64512
      %v616 = vsel %vm615, %v614, -inf
      %617 = vmax.xlane.f32.xlu0 %v616
      %v618 = vpop.xlane.xlu0 %617
      %v619 = vsub.f32 %v614, %v618
      %v620 = vmul.f32 %v619, 1.442695
      %v621 = vpow.pop %v620
      %v622 = vsel %vm615, %v621, 0.0
      %623 = vadd.xlane.f32.xlu0 %v622
      %v624 = vpop.xlane.xlu0 %623
      %v625 = vrcp.pop %v624
      %v626 = vmul.f32 %v621, %v625
      %v627 = vpack.c.bf16 %v626, %v626
      %v628 = vpack.c.bf16 %v585, %v585
      %v630 = vsel %vm615, %v627, 0
      %vm632 = vcmask 1043456
      %v634 = vsel %vm632, %v628, 0
      %636 = vmatpush.bf16.msra.mxu0 0
      %637 = vmatpush.bf16.msra.mxu0 0
      %638 = vmatpush.bf16.msra.mxu0 0
      %639 = vmatpush.bf16.msra.mxu0 0
      %640 = vmatpush.bf16.msra.mxu0 0
      %641 = vmatpush.bf16.msra.mxu0 0
      %642 = vmatpush.bf16.msra.mxu0 0
      %643 = vmatpush.bf16.msra.mxu0 %v634
      %644 = vmatmul.bf16.gmra.mxu0 %v630
      %v645 = vpop.f32.mrf.mxu0
      %v646 = vadd.f32 0.0, %v645
      %v647 = vpop.f32.mrf.mxu0
      %648 = vdwg.mxu0
      %v649 = vpack.c.bf16 %v646, %v646
      %v650 = vld [vmem:[%s4] sm:$0xf]
      %v651 = vld [vmem:[%s4 + $0x4] sm:$0xf]
      %s652 = scalar_lea.vmem %s2, 16
      %v653 = vld [vmem:[%s652] sm:$0xf]
      %v654 = vld [vmem:[%s652 + $0x4] sm:$0xf]
      %v655 = vld [vmem:[%s652 + $0x8] sm:$0xf]
      %v656 = vld [vmem:[%s652 + $0xc] sm:$0xf]
      %s657 = scalar_lea.vmem %s3, 1
      %v658 = vld [vmem:[%s657] sm:$0x1]
      %v660 = vperm.slane %v658, 0
      %v666 = vunpack.c.l.b16 %v653
      %v667 = vunpack.c.l.b16 %v654
      %v668 = vunpack.c.l.b16 %v655
      %v669 = vunpack.c.l.b16 %v656
      %v670 = vpack.c.b16 %v667, %v666
      %v671 = vpack.c.b16 %v669, %v668
      %674 = vmatpush.bf16.msra.mxu0 0
      %675 = vmatpush.bf16.msra.mxu0 0
      %676 = vmatpush.bf16.msra.mxu0 0
      %677 = vmatpush.bf16.msra.mxu0 0
      %678 = vmatpush.bf16.msra.mxu0 0
      %679 = vmatpush.bf16.msra.mxu0 0
      %680 = vmatpush.bf16.msra.mxu0 %v671
      %681 = vmatpush.bf16.msra.mxu0 %v670
      %682 = vmatmul.bf16.gmra.mxu0 %v503
      %v683 = vpop.f32.mrf.mxu0
      %v684 = vadd.f32 %v660, %v683
      %v685 = vpop.f32.mrf.mxu0
      %686 = vdwg.mxu0
      %s687 = scalar_lea.vmem %s2, 48
      %v688 = vld [vmem:[%s687] sm:$0xf]
      %v689 = vld [vmem:[%s687 + $0x4] sm:$0xf]
      %v690 = vld [vmem:[%s687 + $0x8] sm:$0xf]
      %v691 = vld [vmem:[%s687 + $0xc] sm:$0xf]
      %s692 = scalar_lea.vmem %s3, 3
      %v693 = vld [vmem:[%s692] sm:$0x1]
      %v695 = vperm.slane %v693, 0
      %v701 = vunpack.c.l.b16 %v688
      %v702 = vunpack.c.l.b16 %v689
      %v703 = vunpack.c.l.b16 %v690
      %v704 = vunpack.c.l.b16 %v691
      %v705 = vpack.c.b16 %v702, %v701
      %v706 = vpack.c.b16 %v704, %v703
      %709 = vmatpush.bf16.msra.mxu0 0
      %710 = vmatpush.bf16.msra.mxu0 0
      %711 = vmatpush.bf16.msra.mxu0 0
      %712 = vmatpush.bf16.msra.mxu0 0
      %713 = vmatpush.bf16.msra.mxu0 0
      %714 = vmatpush.bf16.msra.mxu0 0
      %715 = vmatpush.bf16.msra.mxu0 %v706
      %716 = vmatpush.bf16.msra.mxu0 %v705
      %717 = vmatmul.bf16.gmra.mxu0 %v503
      %v718 = vpop.f32.mrf.mxu0
      %v719 = vadd.f32 %v695, %v718
      %v720 = vpop.f32.mrf.mxu0
      %721 = vdwg.mxu0
      %s722 = scalar_lea.vmem %s2, 80
      %v723 = vld [vmem:[%s722] sm:$0xf]
      %v724 = vld [vmem:[%s722 + $0x4] sm:$0xf]
      %v725 = vld [vmem:[%s722 + $0x8] sm:$0xf]
      %v726 = vld [vmem:[%s722 + $0xc] sm:$0xf]
      %s727 = scalar_lea.vmem %s3, 5
      %v728 = vld [vmem:[%s727] sm:$0x1]
      %v730 = vperm.slane %v728, 0
      %v736 = vunpack.c.l.b16 %v723
      %v737 = vunpack.c.l.b16 %v724
      %v738 = vunpack.c.l.b16 %v725
      %v739 = vunpack.c.l.b16 %v726
      %v740 = vpack.c.b16 %v737, %v736
      %v741 = vpack.c.b16 %v739, %v738
      %744 = vmatpush.bf16.msra.mxu0 0
      %745 = vmatpush.bf16.msra.mxu0 0
      %746 = vmatpush.bf16.msra.mxu0 0
      %747 = vmatpush.bf16.msra.mxu0 0
      %748 = vmatpush.bf16.msra.mxu0 0
      %749 = vmatpush.bf16.msra.mxu0 0
      %750 = vmatpush.bf16.msra.mxu0 %v741
      %751 = vmatpush.bf16.msra.mxu0 %v740
      %752 = vmatmul.bf16.gmra.mxu0 %v503
      %v753 = vpop.f32.mrf.mxu0
      %v754 = vadd.f32 %v730, %v753
      %v755 = vpop.f32.mrf.mxu0
      %756 = vdwg.mxu0
      %v757 = vpack.c.bf16 %v684, %v684
      %v758 = vpack.c.bf16 %v719, %v719
      %v760 = vsel %vm590, %v757, 0
      %v763 = vsel %vm590, %v758, 0
      %765 = vmatpush.bf16.xpose.msra.mxu0 0
      %766 = vmatpush.bf16.xpose.msra.mxu0 0
      %767 = vmatpush.bf16.xpose.msra.mxu0 0
      %768 = vmatpush.bf16.xpose.msra.mxu0 0
      %769 = vmatpush.bf16.xpose.msra.mxu0 0
      %770 = vmatpush.bf16.xpose.msra.mxu0 0
      %771 = vmatpush.bf16.xpose.msra.mxu0 0
      %772 = vmatpush.bf16.xpose.msra.mxu0 %v763
      %773 = vmatmul.bf16.gmra.mxu0 %v760
      %v774 = vpop.f32.mrf.mxu0
      %v775 = vadd.f32 0.0, %v774
      %v776 = vpop.f32.mrf.mxu0
      %777 = vdwg.mxu0
      %v778 = vmul.f32 %v775, 0.25
      %v779 = vadd.f32 %v778, %v612
      %v780 = vsel %vm615, %v779, -inf
      %781 = vmax.xlane.f32.xlu0 %v780
      %v782 = vpop.xlane.xlu0 %781
      %v783 = vsub.f32 %v779, %v782
      %v784 = vmul.f32 %v783, 1.442695
      %v785 = vpow.pop %v784
      %v786 = vsel %vm615, %v785, 0.0
      %787 = vadd.xlane.f32.xlu0 %v786
      %v788 = vpop.xlane.xlu0 %787
      %v789 = vrcp.pop %v788
      %v790 = vmul.f32 %v785, %v789
      %v791 = vpack.c.bf16 %v790, %v790
      %v792 = vpack.c.bf16 %v754, %v754
      %v794 = vsel %vm615, %v791, 0
      %v797 = vsel %vm632, %v792, 0
      %799 = vmatpush.bf16.msra.mxu0 0
      %800 = vmatpush.bf16.msra.mxu0 0
      %801 = vmatpush.bf16.msra.mxu0 0
      %802 = vmatpush.bf16.msra.mxu0 0
      %803 = vmatpush.bf16.msra.mxu0 0
      %804 = vmatpush.bf16.msra.mxu0 0
      %805 = vmatpush.bf16.msra.mxu0 0
      %806 = vmatpush.bf16.msra.mxu0 %v797
      %807 = vmatmul.bf16.gmra.mxu0 %v794
      %v808 = vpop.f32.mrf.mxu0
      %v809 = vadd.f32 0.0, %v808
      %v810 = vpop.f32.mrf.mxu0
      %811 = vdwg.mxu0
      %v812 = vpack.c.bf16 %v809, %v809
      %s813 = scalar_lea.vmem %s4, 8
      %v814 = vld [vmem:[%s813] sm:$0xf]
      %v815 = vld [vmem:[%s813 + $0x4] sm:$0xf]
      %v818 = vunpack.c.l.b16 %v814
      %v819 = vunpack.c.l.b16 %v815
      %v820 = vpack.c.b16 %v819, %v818
      %v823 = vsel %vm590, %v812, 0
      %825 = vmatpush.bf16.msra.mxu0 0
      %826 = vmatpush.bf16.msra.mxu0 0
      %827 = vmatpush.bf16.msra.mxu0 0
      %828 = vmatpush.bf16.msra.mxu0 0
      %829 = vmatpush.bf16.msra.mxu0 0
      %830 = vmatpush.bf16.msra.mxu0 0
      %831 = vmatpush.bf16.msra.mxu0 0
      %832 = vmatpush.bf16.msra.mxu0 %v820
      %833 = vmatmul.bf16.gmra.mxu0 %v823
      %v834 = vpop.f32.mrf.mxu0
      %v835 = vadd.f32 0.0, %v834
      %v836 = vpop.f32.mrf.mxu0
      %837 = vdwg.mxu0
      %v840 = vunpack.c.l.b16 %v650
      %v841 = vunpack.c.l.b16 %v651
      %v842 = vpack.c.b16 %v841, %v840
      %v845 = vsel %vm590, %v649, 0
      %847 = vmatpush.bf16.msra.mxu0 0
      %848 = vmatpush.bf16.msra.mxu0 0
      %849 = vmatpush.bf16.msra.mxu0 0
      %850 = vmatpush.bf16.msra.mxu0 0
      %851 = vmatpush.bf16.msra.mxu0 0
      %852 = vmatpush.bf16.msra.mxu0 0
      %853 = vmatpush.bf16.msra.mxu0 0
      %854 = vmatpush.bf16.msra.mxu0 %v842
      %855 = vmatmul.bf16.gmra.mxu0 %v845
      %v856 = vpop.f32.mrf.mxu0
      %v857 = vadd.f32 %v835, %v856
      %v858 = vpop.f32.mrf.mxu0
      %859 = vdwg.mxu0
      %v860 = vld [vmem:[%s5] sm:$0x1]
      %v862 = vperm.slane %v860, 0
      %v864 = vadd.f32 %v857, %v862
      %v865 = vadd.f32 %v864, %v478
      %v866 = vld [vmem:[%s6] sm:$0x1]
      %v867 = vld [vmem:[%s7] sm:$0x1]
      %v868 = vsel %vm501, %v865, 0.0
      %869 = vadd.xlane.f32.xlu0 %v868
      %v870 = vpop.xlane.xlu0 %869
      %v871 = vrcp.pop 32.0
      %v872 = vmul.f32 32.0, %v871
      %v873 = vsub.f32 1.0, %v872
      %v874 = vmul.f32 %v871, %v873
      %v875 = vadd.f32 %v871, %v874
      %vm876 = vweird.f32 %v871
      %v877 = vsel %vm876, %v871, %v875
      %v878 = vmul.f32 %v870, %v877
      %v879 = vsub.f32 %v865, %v878
      %v880 = vmul.f32 %v879, %v879
      %v881 = vsel %vm501, %v880, 0.0
      %882 = vadd.xlane.f32.xlu0 %v881
      %v883 = vpop.xlane.xlu0 %882
      %v884 = vmul.f32 %v883, %v877
      %v885 = vadd.f32 %v884, 1e-12
      %v886 = vrsqrt.pop %v885
      %v887 = vmul.f32 %v886, %v885
      %v888 = vmul.f32 %v887, %v886
      %v889 = vmul.f32 0.5, %v888
      %v890 = vsub.f32 1.5, %v889
      %v891 = vmul.f32 %v886, %v890
      %vm892 = vweird.f32 %v885
      %vm893 = vweird.f32 %v886
      %vm894 = vmor %vm892, %vm893
      %v895 = vsel %vm894, %v886, %v891
      %v896 = vmul.f32 %v879, %v895
      %v898 = vperm.slane %v866, 0
      %v900 = vmul.f32 %v896, %v898
      %v902 = vperm.slane %v867, 0
      %v904 = vadd.f32 %v900, %v902
      %v905 = vpack.c.bf16 %v904, %v904
      %v906 = vld [vmem:[%s8] sm:$0xf]
      %v907 = vld [vmem:[%s8 + $0x4] sm:$0xf]
      %v908 = vld [vmem:[%s8 + $0x8] sm:$0xf]
      %v909 = vld [vmem:[%s8 + $0xc] sm:$0xf]
      %v910 = vld [vmem:[%s9] sm:$0x1]
      %v912 = vperm.slane %v910, 0
      %v918 = vunpack.c.l.b16 %v906
      %v919 = vunpack.c.l.b16 %v907
      %v920 = vunpack.c.l.b16 %v908
      %v921 = vunpack.c.l.b16 %v909
      %v922 = vpack.c.b16 %v919, %v918
      %v923 = vpack.c.b16 %v921, %v920
      %v927 = vsel %vm501, %v905, 0
      %929 = vmatpush.bf16.msra.mxu0 0
      %930 = vmatpush.bf16.msra.mxu0 0
      %931 = vmatpush.bf16.msra.mxu0 0
      %932 = vmatpush.bf16.msra.mxu0 0
      %933 = vmatpush.bf16.msra.mxu0 0
      %934 = vmatpush.bf16.msra.mxu0 0
      %935 = vmatpush.bf16.msra.mxu0 %v923
      %936 = vmatpush.bf16.msra.mxu0 %v922
      %937 = vmatmul.bf16.gmra.mxu0 %v927
      %v938 = vpop.f32.mrf.mxu0
      %v939 = vadd.f32 %v912, %v938
      %v940 = vpop.f32.mrf.mxu0
      %941 = vdwg.mxu0
      %v942 = vmul.f32 %v939, 0.5
      %v943 = vmul.f32 %v939, 0.044715
      %v944 = vmul.f32 %v943, %v939
      %v945 = vmul.f32 %v944, %v939
      %v946 = vadd.f32 %v939, %v945
      %v947 = vmul.f32 %v946, 0.7978846
      %v948 = vtanh.pop %v947
      %v949 = vadd.f32 %v948, 1.0
      %v950 = vmul.f32 %v942, %v949
      %v951 = vpack.c.bf16 %v950, %v950
      %v952 = vld [vmem:[%s10] sm:$0xf]
      %v953 = vld [vmem:[%s10 + $0x4] sm:$0xf]
      %v954 = vld [vmem:[%s10 + $0x8] sm:$0xf]
      %v955 = vld [vmem:[%s10 + $0xc] sm:$0xf]
      %v956 = vld [vmem:[%s10 + $0x10] sm:$0xf]
      %v957 = vld [vmem:[%s10 + $0x14] sm:$0xf]
      %v958 = vld [vmem:[%s10 + $0x18] sm:$0xf]
      %v959 = vld [vmem:[%s10 + $0x1c] sm:$0xf]
      %v960 = vld [vmem:[%s10 + $0x20] sm:$0xf]
      %v961 = vld [vmem:[%s10 + $0x24] sm:$0xf]
      %v962 = vld [vmem:[%s10 + $0x28] sm:$0xf]
      %v963 = vld [vmem:[%s10 + $0x2c] sm:$0xf]
      %v964 = vld [vmem:[%s10 + $0x30] sm:$0xf]
      %v965 = vld [vmem:[%s10 + $0x34] sm:$0xf]
      %v966 = vld [vmem:[%s10 + $0x38] sm:$0xf]
      %v967 = vld [vmem:[%s10 + $0x3c] sm:$0xf]
      %v968 = vld [vmem:[%s11] sm:$0x1]
      %v970 = vperm.slane %v968, 0
      %v988 = vunpack.c.l.b16 %v952
      %v989 = vunpack.c.l.b16 %v953
      %v990 = vunpack.c.l.b16 %v954
      %v991 = vunpack.c.l.b16 %v955
      %v992 = vunpack.c.l.b16 %v956
      %v993 = vunpack.c.l.b16 %v957
      %v994 = vunpack.c.l.b16 %v958
      %v995 = vunpack.c.l.b16 %v959
      %v996 = vunpack.c.l.b16 %v960
      %v997 = vunpack.c.l.b16 %v961
      %v998 = vunpack.c.l.b16 %v962
      %v999 = vunpack.c.l.b16 %v963
      %v1000 = vunpack.c.l.b16 %v964
      %v1001 = vunpack.c.l.b16 %v965
      %v1002 = vunpack.c.l.b16 %v966
      %v1003 = vunpack.c.l.b16 %v967
      %v1004 = vpack.c.b16 %v989, %v988
      %v1005 = vpack.c.b16 %v991, %v990
      %v1006 = vpack.c.b16 %v993, %v992
      %v1007 = vpack.c.b16 %v995, %v994
      %v1008 = vpack.c.b16 %v997, %v996
      %v1009 = vpack.c.b16 %v999, %v998
      %v1010 = vpack.c.b16 %v1001, %v1000
      %v1011 = vpack.c.b16 %v1003, %v1002
      %1020 = vmatpush.bf16.msra.mxu0 %v1011
      %1021 = vmatpush.bf16.msra.mxu0 %v1010
      %1022 = vmatpush.bf16.msra.mxu0 %v1009
      %1023 = vmatpush.bf16.msra.mxu0 %v1008
      %1024 = vmatpush.bf16.msra.mxu0 %v1007
      %1025 = vmatpush.bf16.msra.mxu0 %v1006
      %1026 = vmatpush.bf16.msra.mxu0 %v1005
      %1027 = vmatpush.bf16.msra.mxu0 %v1004
      %1028 = vmatmul.bf16.gmra.mxu0 %v951
      %v1029 = vpop.f32.mrf.mxu0
      %v1030 = vadd.f32 %v970, %v1029
      %v1031 = vpop.f32.mrf.mxu0
      %1032 = vdwg.mxu0
      %v1033 = vadd.f32 %v1030, %v904
      %v1034 = vld [vmem:[%s12] sm:$0x1]
      %v1035 = vld [vmem:[%s13] sm:$0x1]
      %v1036 = vsel %vm501, %v1033, 0.0
      %1037 = vadd.xlane.f32.xlu0 %v1036
      %v1038 = vpop.xlane.xlu0 %1037
      %v1039 = vmul.f32 %v1038, %v877
      %v1040 = vsub.f32 %v1033, %v1039
      %v1041 = vmul.f32 %v1040, %v1040
      %v1042 = vsel %vm501, %v1041, 0.0
      %1043 = vadd.xlane.f32.xlu0 %v1042
      %v1044 = vpop.xlane.xlu0 %1043
      %v1045 = vmul.f32 %v1044, %v877
      %v1046 = vadd.f32 %v1045, 1e-12
      %v1047 = vrsqrt.pop %v1046
      %v1048 = vmul.f32 %v1047, %v1046
      %v1049 = vmul.f32 %v1048, %v1047
      %v1050 = vmul.f32 0.5, %v1049
      %v1051 = vsub.f32 1.5, %v1050
      %v1052 = vmul.f32 %v1047, %v1051
      %vm1053 = vweird.f32 %v1046
      %vm1054 = vweird.f32 %v1047
      %vm1055 = vmor %vm1053, %vm1054
      %v1056 = vsel %vm1055, %v1047, %v1052
      %v1057 = vmul.f32 %v1040, %v1056
      %v1059 = vperm.slane %v1034, 0
      %v1061 = vmul.f32 %v1057, %v1059
      %v1063 = vperm.slane %v1035, 0
      %v1065 = vadd.f32 %v1061, %v1063
      %1066 = vst.msk [vmem:[%s476] sm:$0xff] %vm501, %v1065
      %p1067 = scmp.lt.s32.totalorder %s25, 1
      %s1068 = scalar_select %p1067, %s25, 1
      %s1069 = smul.addr %s1068, 8
      %s1070 = scalar_lea.vmem %s14, %s1069
      // Predicated region
      $region77: #{bert_forward.5} parent=75 // pred_check
        %p1071 = pneg %p347
      $region78: #{bert_forward.5} parent=75 // pred_check_branch
        %1073 = sbr.rel (%p1071) target = $region80
      $region79: #{bert_forward.5} parent=75 // pred_region
        _
      $region80: #{bert_forward.5} parent=75 // pred_fallthru
        _
    $region76: #{bert_forward.5} parent=5 // pred_fallthru
      _
    %p1074 = scmp.le.s32.totalorder 2, %s20
    // Predicated region
    $region81: #{bert_forward.5} parent=5 // pred_check
      %p1075 = pneg %p1074
    $region82: #{bert_forward.5} parent=5 // pred_check_branch
      %1077 = sbr.rel (%p1075) target = $region84
    $region83: #{bert_forward.5} parent=5 // pred_region
      %s1078 = ssub.s32 %s20, 2
      // Predicated region
      $region85: #{bert_forward.5} parent=83 // pred_check
        %p1079 = pneg %p353
      $region86: #{bert_forward.5} parent=83 // pred_check_branch
        %1081 = sbr.rel (%p1079) target = $region88
      $region87: #{bert_forward.5} parent=83 // pred_region
        %p1082 = scmp.lt.s32.totalorder %s26, 1
        %s1083 = scalar_select %p1082, %s26, 1
        %s1084 = smul.addr %s1083, 8
        %s1085 = scalar_lea.vmem %s14, %s1084
      $region88: #{bert_forward.5} parent=83 // pred_fallthru
        _
    $region84: #{bert_forward.5} parent=5 // pred_fallthru
      _
  $region6: #{bert_forward.5} parent=0 // loop_footer
    %s24 = sadd.s32 1, %s20
  $region7: #{bert_forward.5} parent=0 // loop_footer_branch
    %19 = sbr.rel target = $region3
  $region8: #{bert_forward.5} parent=0 // loop_exit
    _

</llo_original>
